<compile_context>
chip_gen: v7x
topology: tpu7x:2x2x1
jax: 0.10.0
libtpu: 0.0.40
codegen_flags: <defaults>
</compile_context>

<pallas_src>
import jax
import jax.numpy as jnp
from jax.experimental import pallas as pl
from jax.experimental.pallas import tpu as pltpu

EPS = 1e-5


def _residual_block_kernel(x_ref, w1b_ref, w2b_ref, wsb_ref, bn_ref, grp_ref,
                           shift_ref, o_ref):
    # x_ref    : (N*H, W*Cin)        lane-dense input (row = n*H + h, lane = w*Cin + ci)
    # w1b_ref  : (3, W*Cin, W*Cout)  banded conv1 weight (one band per kernel row dy)
    # w2b_ref  : (3, W*Cout, W*Cout) banded conv2 weight
    # wsb_ref  : (W*Cin, W*Cout)     block-diagonal 1x1 shortcut weight
    # bn_ref   : (6, W*Cout)         [g1,b1,g2,b2,g_sc,b_sc], pre-tiled to lane layout
    # grp_ref  : (W*Cout, W*Cout)    channel-group averaging matrix -> per-channel mean,
    #                                lane-broadcast, in one tiny matmul
    # shift_ref: (2, N*H, N*H)       [up, down] row-shift matrices; image-boundary rows
    #                                are all-zero so the H 'same' padding is built in
    # o_ref    : (N*H, W*Cout)       lane-dense output slab
    x2d = x_ref[...]
    grp = grp_ref[...]
    bn = bn_ref[...]
    p_up = shift_ref[0]
    p_dn = shift_ref[1]

    def conv3x3(a2d, wb_ref):
        # dy=1 (center row) uses the activation directly; dy=0/2 use row-shifted
        # copies produced by a tiny (NH,NH) matmul that also zero-fills halo rows.
        up = jnp.dot(p_up, a2d, preferred_element_type=jnp.float32)   # row h-1 (0 at top)
        dn = jnp.dot(p_dn, a2d, preferred_element_type=jnp.float32)   # row h+1 (0 at bottom)
        acc = jnp.dot(up, wb_ref[0], preferred_element_type=jnp.float32)
        acc = acc + jnp.dot(a2d, wb_ref[1], preferred_element_type=jnp.float32)
        acc = acc + jnp.dot(dn, wb_ref[2], preferred_element_type=jnp.float32)
        return acc

    def bn_scale_shift(a, gamma_l, beta_l):
        # single-pass folded training-mode BN: var = E[x^2] - E[x]^2.
        col_s = jnp.sum(a, axis=0, keepdims=True)              # (1, W*Cout)
        col_ss = jnp.sum(a * a, axis=0, keepdims=True)          # (1, W*Cout)
        mean_l = jnp.dot(col_s, grp, preferred_element_type=jnp.float32)
        ex2_l = jnp.dot(col_ss, grp, preferred_element_type=jnp.float32)
        scale_l = gamma_l * jax.lax.rsqrt(ex2_l - mean_l * mean_l + EPS)
        shift_l = beta_l - mean_l * scale_l
        return scale_l, shift_l

    # ---- conv1 -> bn1 -> relu ----
    a1 = conv3x3(x2d, w1b_ref)
    s1, t1 = bn_scale_shift(a1, bn[0:1, :], bn[1:2, :])
    h1 = jnp.maximum(a1 * s1 + t1, 0.0)                         # (NH, W*Cout)

    # ---- conv2 -> bn2 ----
    a2 = conv3x3(h1, w2b_ref)
    s2, t2 = bn_scale_shift(a2, bn[2:3, :], bn[3:4, :])

    # ---- shortcut: 1x1 conv (block-diag weight) on the raw input -> bn ----
    a_sc = jnp.dot(x2d, wsb_ref[...], preferred_element_type=jnp.float32)
    s_sc, t_sc = bn_scale_shift(a_sc, bn[4:5, :], bn[5:6, :])

    # ---- residual add (both BN shifts folded into one) + relu, lane-dense store ----
    o_ref[...] = jnp.maximum(a2 * s2 + a_sc * s_sc + (t2 + t_sc), 0.0)


def _banded_conv_weight(w, width):
    """(3,3,Cin,Cout) HWIO -> (3, width*Cin, width*Cout).

    For each kernel row dy, the 3 dx taps and the W-direction 'same' zero padding are
    folded into a banded block matrix: block (w_in, w_out) holds w[dy, dx] where
    w_in = w_out + dx - 1 (out-of-range taps are simply absent == zero padding).
    """
    kh, kw = w.shape[0], w.shape[1]
    bands = []
    for dy in range(kh):
        m = None
        for dx in range(kw):
            band = jnp.kron(jnp.eye(width, k=1 - dx, dtype=w.dtype), w[dy, dx])
            m = band if m is None else m + band
        bands.append(m)
    return jnp.stack(bands, axis=0)


def _row_shift_matrices(n_img, h):
    """(2, N*H, N*H) [up, down]: up @ x gives x[row-1] within each image, 0 at halos."""
    nh = n_img * h
    i = jnp.arange(nh)
    same_img = (i[:, None] // h) == (i[None, :] // h)
    p_up = ((i[None, :] == i[:, None] - 1) & same_img).astype(jnp.float32)
    p_dn = ((i[None, :] == i[:, None] + 1) & same_img).astype(jnp.float32)
    return jnp.stack([p_up, p_dn], axis=0)


def residual_block(x_nhwc, w1, w2, ws, bn_params):
    N, H, W, Cin = x_nhwc.shape
    Cout = w1.shape[-1]
    WCin, WCout = W * Cin, W * Cout

    # Layout plumbing only (no compute hoisted out of the kernel):
    x2d = x_nhwc.reshape(N * H, WCin)                      # lane-dense input rows
    w1b = _banded_conv_weight(w1, W)                       # (3, WCin, WCout)
    w2b = _banded_conv_weight(w2, W)                       # (3, WCout, WCout)
    wsb = jnp.kron(jnp.eye(W, dtype=ws.dtype), ws)         # (WCin, WCout) block-diag 1x1
    bn_l = jnp.tile(bn_params, (1, W))                     # (6, WCout) per-lane gamma/beta
    lane_ch = jnp.arange(WCout) % Cout
    grp = (lane_ch[:, None] == lane_ch[None, :]).astype(jnp.float32) / float(N * H * W)
    shifts = _row_shift_matrices(N, H)                     # (2, N*H, N*H)

    vmem = pl.BlockSpec(memory_space=pltpu.MemorySpace.VMEM)
    out2d = pl.pallas_call(
        _residual_block_kernel,
        out_shape=jax.ShapeDtypeStruct((N * H, WCout), jnp.float32),
        in_specs=[vmem] * 7,
        out_specs=vmem,
    )(x2d, w1b, w2b, wsb, bn_l, grp, shifts)
    return out2d.reshape(N, H, W, Cout)


def residual_block_ref(x_nhwc, w1, w2, ws, bn_params):
    """Pure-JAX reference for correctness checking."""
    def conv(x, w, padding):
        return jax.lax.conv_general_dilated(
            x, w, (1, 1), padding, dimension_numbers=('NHWC', 'HWIO', 'NHWC'))

    def bn(x, gamma, beta):
        mean = jnp.mean(x, axis=(0, 1, 2), keepdims=True)
        var = jnp.mean((x - mean) ** 2, axis=(0, 1, 2), keepdims=True)
        return gamma * (x - mean) * jax.lax.rsqrt(var + EPS) + beta

    out = jax.nn.relu(bn(conv(x_nhwc, w1, 'SAME'), bn_params[0], bn_params[1]))
    out = bn(conv(out, w2, 'SAME'), bn_params[2], bn_params[3])
    sc = bn(conv(x_nhwc, ws.reshape(1, 1, *ws.shape), 'VALID'),
            bn_params[4], bn_params[5])
    return jax.nn.relu(out + sc)


if __name__ == "__main__":
    key = jax.random.PRNGKey(0)
    k = jax.random.split(key, 6)

    # PyTorch-equivalent input: NCHW (2, 4, 16, 16)  ->  NHWC (2, 16, 16, 4)
    N, H, W, Cin, Cout = 2, 16, 16, 4, 8

    x = jax.random.normal(k[0], (N, H, W, Cin), jnp.float32)
    w1 = 0.1 * jax.random.normal(k[1], (3, 3, Cin, Cout), jnp.float32)
    w2 = 0.1 * jax.random.normal(k[2], (3, 3, Cout, Cout), jnp.float32)
    ws = 0.1 * jax.random.normal(k[3], (Cin, Cout), jnp.float32)
    gammas = 1.0 + 0.1 * jax.random.normal(k[4], (3, Cout), jnp.float32)
    betas = 0.1 * jax.random.normal(k[5], (3, Cout), jnp.float32)
    bn_params = jnp.stack(
        [gammas[0], betas[0], gammas[1], betas[1], gammas[2], betas[2]], axis=0)

    out = residual_block(x, w1, w2, ws, bn_params)
    jax.block_until_ready(out)

    ref = residual_block_ref(x, w1, w2, ws, bn_params)
    assert out.shape == (N, H, W, Cout)
    assert jnp.allclose(out, ref, atol=1e-4, rtol=1e-4), "Pallas kernel mismatch vs reference"

    print("KERNEL_OK")
</pallas_src>

<mosaic_0001>
module attributes {stable_mosaic.version = 11 : i64} {
  func.func @_residual_block_kernel(%arg0: memref<32x64xf32, #tpu.memory_space<vmem>>, %arg1: memref<3x64x128xf32, #tpu.memory_space<vmem>>, %arg2: memref<3x128x128xf32, #tpu.memory_space<vmem>>, %arg3: memref<64x128xf32, #tpu.memory_space<vmem>>, %arg4: memref<6x128xf32, #tpu.memory_space<vmem>>, %arg5: memref<128x128xf32, #tpu.memory_space<vmem>>, %arg6: memref<2x32x32xf32, #tpu.memory_space<vmem>>, %arg7: memref<32x128xf32, #tpu.memory_space<vmem>>) attributes {dimension_semantics = [], scalar_prefetch = 0 : i64, scratch_operands = 0 : i64, tpu.core_type = #tpu.core_type<tc>} {
    %c0 = arith.constant 0 : index
    %c0_0 = arith.constant 0 : index
    %0 = vector.load %arg0[%c0, %c0_0] : memref<32x64xf32, #tpu.memory_space<vmem>>, vector<32x64xf32>
    %c0_1 = arith.constant 0 : index
    %c0_2 = arith.constant 0 : index
    %1 = vector.load %arg5[%c0_1, %c0_2] : memref<128x128xf32, #tpu.memory_space<vmem>>, vector<128x128xf32>
    %c0_3 = arith.constant 0 : index
    %c0_4 = arith.constant 0 : index
    %2 = vector.load %arg4[%c0_3, %c0_4] : memref<6x128xf32, #tpu.memory_space<vmem>>, vector<6x128xf32>
    %c0_5 = arith.constant 0 : index
    %c0_6 = arith.constant 0 : index
    %c0_7 = arith.constant 0 : index
    %3 = vector.load %arg6[%c0_5, %c0_6, %c0_7] : memref<2x32x32xf32, #tpu.memory_space<vmem>>, vector<1x32x32xf32>
    %4 = vector.shape_cast %3 : vector<1x32x32xf32> to vector<32x32xf32>
    %c1 = arith.constant 1 : index
    %c0_8 = arith.constant 0 : index
    %c0_9 = arith.constant 0 : index
    %5 = vector.load %arg6[%c1, %c0_8, %c0_9] : memref<2x32x32xf32, #tpu.memory_space<vmem>>, vector<1x32x32xf32>
    %6 = vector.shape_cast %5 : vector<1x32x32xf32> to vector<32x32xf32>
    %cst = arith.constant dense<0.000000e+00> : vector<32x64xf32>
    %7 = tpu.matmul %4, %0, %cst {dimension_numbers = #tpu.dot_dimension_numbers<[1], [0], [0], [1], [0, 0, 1, 1], [], []>} : vector<32x32xf32>, vector<32x64xf32>, vector<32x64xf32> -> vector<32x64xf32>
    %cst_10 = arith.constant dense<0.000000e+00> : vector<32x64xf32>
    %8 = tpu.matmul %6, %0, %cst_10 {dimension_numbers = #tpu.dot_dimension_numbers<[1], [0], [0], [1], [0, 0, 1, 1], [], []>} : vector<32x32xf32>, vector<32x64xf32>, vector<32x64xf32> -> vector<32x64xf32>
    %c0_11 = arith.constant 0 : index
    %c0_12 = arith.constant 0 : index
    %c0_13 = arith.constant 0 : index
    %9 = vector.load %arg1[%c0_11, %c0_12, %c0_13] : memref<3x64x128xf32, #tpu.memory_space<vmem>>, vector<1x64x128xf32>
    %10 = vector.shape_cast %9 : vector<1x64x128xf32> to vector<64x128xf32>
    %cst_14 = arith.constant dense<0.000000e+00> : vector<32x128xf32>
    %11 = tpu.matmul %7, %10, %cst_14 {dimension_numbers = #tpu.dot_dimension_numbers<[1], [0], [0], [1], [0, 0, 1, 1], [], []>} : vector<32x64xf32>, vector<64x128xf32>, vector<32x128xf32> -> vector<32x128xf32>
    %c1_15 = arith.constant 1 : index
    %c0_16 = arith.constant 0 : index
    %c0_17 = arith.constant 0 : index
    %12 = vector.load %arg1[%c1_15, %c0_16, %c0_17] : memref<3x64x128xf32, #tpu.memory_space<vmem>>, vector<1x64x128xf32>
    %13 = vector.shape_cast %12 : vector<1x64x128xf32> to vector<64x128xf32>
    %cst_18 = arith.constant dense<0.000000e+00> : vector<32x128xf32>
    %14 = tpu.matmul %0, %13, %cst_18 {dimension_numbers = #tpu.dot_dimension_numbers<[1], [0], [0], [1], [0, 0, 1, 1], [], []>} : vector<32x64xf32>, vector<64x128xf32>, vector<32x128xf32> -> vector<32x128xf32>
    %15 = arith.addf %11, %14 : vector<32x128xf32>
    %c2 = arith.constant 2 : index
    %c0_19 = arith.constant 0 : index
    %c0_20 = arith.constant 0 : index
    %16 = vector.load %arg1[%c2, %c0_19, %c0_20] : memref<3x64x128xf32, #tpu.memory_space<vmem>>, vector<1x64x128xf32>
    %17 = vector.shape_cast %16 : vector<1x64x128xf32> to vector<64x128xf32>
    %cst_21 = arith.constant dense<0.000000e+00> : vector<32x128xf32>
    %18 = tpu.matmul %8, %17, %cst_21 {dimension_numbers = #tpu.dot_dimension_numbers<[1], [0], [0], [1], [0, 0, 1, 1], [], []>} : vector<32x64xf32>, vector<64x128xf32>, vector<32x128xf32> -> vector<32x128xf32>
    %19 = arith.addf %15, %18 : vector<32x128xf32>
    %20 = vector.extract_strided_slice %2 {offsets = [0, 0], sizes = [1, 128], strides = [1, 1]} : vector<6x128xf32> to vector<1x128xf32>
    %21 = vector.extract_strided_slice %2 {offsets = [1, 0], sizes = [1, 128], strides = [1, 1]} : vector<6x128xf32> to vector<1x128xf32>
    %cst_22 = arith.constant dense<0.000000e+00> : vector<128xf32>
    %22 = vector.multi_reduction <add>, %19, %cst_22 [0] : vector<32x128xf32> to vector<128xf32>
    %23 = vector.shape_cast %22 : vector<128xf32> to vector<1x128xf32>
    %24 = arith.mulf %19, %19 : vector<32x128xf32>
    %cst_23 = arith.constant dense<0.000000e+00> : vector<128xf32>
    %25 = vector.multi_reduction <add>, %24, %cst_23 [0] : vector<32x128xf32> to vector<128xf32>
    %26 = vector.shape_cast %25 : vector<128xf32> to vector<1x128xf32>
    %cst_24 = arith.constant dense<0.000000e+00> : vector<1x128xf32>
    %27 = tpu.matmul %23, %1, %cst_24 {dimension_numbers = #tpu.dot_dimension_numbers<[1], [0], [0], [1], [0, 0, 1, 1], [], []>} : vector<1x128xf32>, vector<128x128xf32>, vector<1x128xf32> -> vector<1x128xf32>
    %cst_25 = arith.constant dense<0.000000e+00> : vector<1x128xf32>
    %28 = tpu.matmul %26, %1, %cst_25 {dimension_numbers = #tpu.dot_dimension_numbers<[1], [0], [0], [1], [0, 0, 1, 1], [], []>} : vector<1x128xf32>, vector<128x128xf32>, vector<1x128xf32> -> vector<1x128xf32>
    %29 = arith.mulf %27, %27 : vector<1x128xf32>
    %30 = arith.subf %28, %29 : vector<1x128xf32>
    %cst_26 = arith.constant 9.99999974E-6 : f32
    %31 = vector.broadcast %cst_26 : f32 to vector<1x128xf32>
    %32 = arith.addf %30, %31 : vector<1x128xf32>
    %33 = math.rsqrt %32 : vector<1x128xf32>
    %34 = arith.mulf %20, %33 : vector<1x128xf32>
    %35 = arith.mulf %27, %34 : vector<1x128xf32>
    %36 = arith.subf %21, %35 : vector<1x128xf32>
    %37 = vector.broadcast %34 : vector<1x128xf32> to vector<32x128xf32>
    %38 = arith.mulf %19, %37 : vector<32x128xf32>
    %39 = vector.broadcast %36 : vector<1x128xf32> to vector<32x128xf32>
    %40 = arith.addf %38, %39 : vector<32x128xf32>
    %cst_27 = arith.constant 0.000000e+00 : f32
    %41 = vector.broadcast %cst_27 : f32 to vector<32x128xf32>
    %42 = arith.maximumf %40, %41 : vector<32x128xf32>
    %cst_28 = arith.constant dense<0.000000e+00> : vector<32x128xf32>
    %43 = tpu.matmul %4, %42, %cst_28 {dimension_numbers = #tpu.dot_dimension_numbers<[1], [0], [0], [1], [0, 0, 1, 1], [], []>} : vector<32x32xf32>, vector<32x128xf32>, vector<32x128xf32> -> vector<32x128xf32>
    %cst_29 = arith.constant dense<0.000000e+00> : vector<32x128xf32>
    %44 = tpu.matmul %6, %42, %cst_29 {dimension_numbers = #tpu.dot_dimension_numbers<[1], [0], [0], [1], [0, 0, 1, 1], [], []>} : vector<32x32xf32>, vector<32x128xf32>, vector<32x128xf32> -> vector<32x128xf32>
    %c0_30 = arith.constant 0 : index
    %c0_31 = arith.constant 0 : index
    %c0_32 = arith.constant 0 : index
    %45 = vector.load %arg2[%c0_30, %c0_31, %c0_32] : memref<3x128x128xf32, #tpu.memory_space<vmem>>, vector<1x128x128xf32>
    %46 = vector.shape_cast %45 : vector<1x128x128xf32> to vector<128x128xf32>
    %cst_33 = arith.constant dense<0.000000e+00> : vector<32x128xf32>
    %47 = tpu.matmul %43, %46, %cst_33 {dimension_numbers = #tpu.dot_dimension_numbers<[1], [0], [0], [1], [0, 0, 1, 1], [], []>} : vector<32x128xf32>, vector<128x128xf32>, vector<32x128xf32> -> vector<32x128xf32>
    %c1_34 = arith.constant 1 : index
    %c0_35 = arith.constant 0 : index
    %c0_36 = arith.constant 0 : index
    %48 = vector.load %arg2[%c1_34, %c0_35, %c0_36] : memref<3x128x128xf32, #tpu.memory_space<vmem>>, vector<1x128x128xf32>
    %49 = vector.shape_cast %48 : vector<1x128x128xf32> to vector<128x128xf32>
    %cst_37 = arith.constant dense<0.000000e+00> : vector<32x128xf32>
    %50 = tpu.matmul %42, %49, %cst_37 {dimension_numbers = #tpu.dot_dimension_numbers<[1], [0], [0], [1], [0, 0, 1, 1], [], []>} : vector<32x128xf32>, vector<128x128xf32>, vector<32x128xf32> -> vector<32x128xf32>
    %51 = arith.addf %47, %50 : vector<32x128xf32>
    %c2_38 = arith.constant 2 : index
    %c0_39 = arith.constant 0 : index
    %c0_40 = arith.constant 0 : index
    %52 = vector.load %arg2[%c2_38, %c0_39, %c0_40] : memref<3x128x128xf32, #tpu.memory_space<vmem>>, vector<1x128x128xf32>
    %53 = vector.shape_cast %52 : vector<1x128x128xf32> to vector<128x128xf32>
    %cst_41 = arith.constant dense<0.000000e+00> : vector<32x128xf32>
    %54 = tpu.matmul %44, %53, %cst_41 {dimension_numbers = #tpu.dot_dimension_numbers<[1], [0], [0], [1], [0, 0, 1, 1], [], []>} : vector<32x128xf32>, vector<128x128xf32>, vector<32x128xf32> -> vector<32x128xf32>
    %55 = arith.addf %51, %54 : vector<32x128xf32>
    %56 = vector.extract_strided_slice %2 {offsets = [2, 0], sizes = [1, 128], strides = [1, 1]} : vector<6x128xf32> to vector<1x128xf32>
    %57 = vector.extract_strided_slice %2 {offsets = [3, 0], sizes = [1, 128], strides = [1, 1]} : vector<6x128xf32> to vector<1x128xf32>
    %cst_42 = arith.constant dense<0.000000e+00> : vector<128xf32>
    %58 = vector.multi_reduction <add>, %55, %cst_42 [0] : vector<32x128xf32> to vector<128xf32>
    %59 = vector.shape_cast %58 : vector<128xf32> to vector<1x128xf32>
    %60 = arith.mulf %55, %55 : vector<32x128xf32>
    %cst_43 = arith.constant dense<0.000000e+00> : vector<128xf32>
    %61 = vector.multi_reduction <add>, %60, %cst_43 [0] : vector<32x128xf32> to vector<128xf32>
    %62 = vector.shape_cast %61 : vector<128xf32> to vector<1x128xf32>
    %cst_44 = arith.constant dense<0.000000e+00> : vector<1x128xf32>
    %63 = tpu.matmul %59, %1, %cst_44 {dimension_numbers = #tpu.dot_dimension_numbers<[1], [0], [0], [1], [0, 0, 1, 1], [], []>} : vector<1x128xf32>, vector<128x128xf32>, vector<1x128xf32> -> vector<1x128xf32>
    %cst_45 = arith.constant dense<0.000000e+00> : vector<1x128xf32>
    %64 = tpu.matmul %62, %1, %cst_45 {dimension_numbers = #tpu.dot_dimension_numbers<[1], [0], [0], [1], [0, 0, 1, 1], [], []>} : vector<1x128xf32>, vector<128x128xf32>, vector<1x128xf32> -> vector<1x128xf32>
    %65 = arith.mulf %63, %63 : vector<1x128xf32>
    %66 = arith.subf %64, %65 : vector<1x128xf32>
    %cst_46 = arith.constant 9.99999974E-6 : f32
    %67 = vector.broadcast %cst_46 : f32 to vector<1x128xf32>
    %68 = arith.addf %66, %67 : vector<1x128xf32>
    %69 = math.rsqrt %68 : vector<1x128xf32>
    %70 = arith.mulf %56, %69 : vector<1x128xf32>
    %71 = arith.mulf %63, %70 : vector<1x128xf32>
    %72 = arith.subf %57, %71 : vector<1x128xf32>
    %c0_47 = arith.constant 0 : index
    %c0_48 = arith.constant 0 : index
    %73 = vector.load %arg3[%c0_47, %c0_48] : memref<64x128xf32, #tpu.memory_space<vmem>>, vector<64x128xf32>
    %cst_49 = arith.constant dense<0.000000e+00> : vector<32x128xf32>
    %74 = tpu.matmul %0, %73, %cst_49 {dimension_numbers = #tpu.dot_dimension_numbers<[1], [0], [0], [1], [0, 0, 1, 1], [], []>} : vector<32x64xf32>, vector<64x128xf32>, vector<32x128xf32> -> vector<32x128xf32>
    %75 = vector.extract_strided_slice %2 {offsets = [4, 0], sizes = [1, 128], strides = [1, 1]} : vector<6x128xf32> to vector<1x128xf32>
    %76 = vector.extract_strided_slice %2 {offsets = [5, 0], sizes = [1, 128], strides = [1, 1]} : vector<6x128xf32> to vector<1x128xf32>
    %cst_50 = arith.constant dense<0.000000e+00> : vector<128xf32>
    %77 = vector.multi_reduction <add>, %74, %cst_50 [0] : vector<32x128xf32> to vector<128xf32>
    %78 = vector.shape_cast %77 : vector<128xf32> to vector<1x128xf32>
    %79 = arith.mulf %74, %74 : vector<32x128xf32>
    %cst_51 = arith.constant dense<0.000000e+00> : vector<128xf32>
    %80 = vector.multi_reduction <add>, %79, %cst_51 [0] : vector<32x128xf32> to vector<128xf32>
    %81 = vector.shape_cast %80 : vector<128xf32> to vector<1x128xf32>
    %cst_52 = arith.constant dense<0.000000e+00> : vector<1x128xf32>
    %82 = tpu.matmul %78, %1, %cst_52 {dimension_numbers = #tpu.dot_dimension_numbers<[1], [0], [0], [1], [0, 0, 1, 1], [], []>} : vector<1x128xf32>, vector<128x128xf32>, vector<1x128xf32> -> vector<1x128xf32>
    %cst_53 = arith.constant dense<0.000000e+00> : vector<1x128xf32>
    %83 = tpu.matmul %81, %1, %cst_53 {dimension_numbers = #tpu.dot_dimension_numbers<[1], [0], [0], [1], [0, 0, 1, 1], [], []>} : vector<1x128xf32>, vector<128x128xf32>, vector<1x128xf32> -> vector<1x128xf32>
    %84 = arith.mulf %82, %82 : vector<1x128xf32>
    %85 = arith.subf %83, %84 : vector<1x128xf32>
    %cst_54 = arith.constant 9.99999974E-6 : f32
    %86 = vector.broadcast %cst_54 : f32 to vector<1x128xf32>
    %87 = arith.addf %85, %86 : vector<1x128xf32>
    %88 = math.rsqrt %87 : vector<1x128xf32>
    %89 = arith.mulf %75, %88 : vector<1x128xf32>
    %90 = arith.mulf %82, %89 : vector<1x128xf32>
    %91 = arith.subf %76, %90 : vector<1x128xf32>
    %92 = vector.broadcast %70 : vector<1x128xf32> to vector<32x128xf32>
    %93 = arith.mulf %55, %92 : vector<32x128xf32>
    %94 = vector.broadcast %89 : vector<1x128xf32> to vector<32x128xf32>
    %95 = arith.mulf %74, %94 : vector<32x128xf32>
    %96 = arith.addf %93, %95 : vector<32x128xf32>
    %97 = arith.addf %72, %91 : vector<1x128xf32>
    %98 = vector.broadcast %97 : vector<1x128xf32> to vector<32x128xf32>
    %99 = arith.addf %96, %98 : vector<32x128xf32>
    %cst_55 = arith.constant 0.000000e+00 : f32
    %100 = vector.broadcast %cst_55 : f32 to vector<32x128xf32>
    %101 = arith.maximumf %99, %100 : vector<32x128xf32>
    %c0_56 = arith.constant 0 : index
    %c0_57 = arith.constant 0 : index
    %102 = vector.load %arg7[%c0_56, %c0_57] : memref<32x128xf32, #tpu.memory_space<vmem>>, vector<32x128xf32>
    tpu.vector_store %arg7[%c0_56, %c0_57], %101 {strides = array<i32>} : memref<32x128xf32, #tpu.memory_space<vmem>>, vector<32x128xf32>,
    return
  }
}

</mosaic_0001>

<llo_original>
// kernel: tpu_custom_call.1
$region0: #{tpu_custom_call.1}
  #allocation0 [shape = 'u32[]', space=smem, size = 0x4, offset = 0x4, fixed_abs, tag = 'smem constant byte address 0x4 - core index']
  #allocation1 [shape = 'u32[144,128]{1,0:T(1,128)}', space=vmem, size = 0x12000, scoped, tag = 'internal scratch']
  %s0 = inlined_call_operand.hbm [shape: f32[32,64], index: 0, kind: input, shape index: {}]
  %s1 = inlined_call_operand.hbm [shape: f32[3,64,128], index: 1, kind: input, shape index: {}]
  %s2 = inlined_call_operand.hbm [shape: f32[3,128,128], index: 2, kind: input, shape index: {}]
  %s3 = inlined_call_operand.hbm [shape: f32[64,128], index: 3, kind: input, shape index: {}]
  %s4 = inlined_call_operand.vmem [shape: f32[6,128], index: 4, kind: input, shape index: {}]
  %s5 = inlined_call_operand.hbm [shape: f32[128,128], index: 5, kind: input, shape index: {}]
  %s6 = inlined_call_operand.hbm [shape: f32[2,32,32], index: 6, kind: input, shape index: {}]
  %s7 = inlined_call_operand.hbm [shape: f32[32,128], index: 7, kind: output, shape index: {}]
  %s8 = sld [smem:[#allocation0]]
  $region62: #{tpu_custom_call.1} parent=0
    _
  %s10 = ssub.s32 1, %s8
  %s11 = scalar_select 0, %s10, %s8
  $region1: #{tpu_custom_call.1} parent=0
    #allocation2 [shape = 'u8[16384]{0}', space=vmem, size = 0x4000, scoped, tag = 'input window, operand 0, single buffered']
    #allocation3 [shape = 's32[1]{0}', space=sflag, size = 0x4, scoped, tag = 'scoped memory for tpu_custom_call.1']
    #allocation4 [shape = 's32[1]{0}', space=sflag, size = 0x4, scoped, tag = 'scoped memory for tpu_custom_call.1']
    #allocation5 [shape = 'u8[98304]{0}', space=vmem, size = 0x18000, scoped, tag = 'input window, operand 1, single buffered']
    #allocation6 [shape = 's32[1]{0}', space=sflag, size = 0x4, scoped, tag = 'scoped memory for tpu_custom_call.1']
    #allocation7 [shape = 'u8[196608]{0}', space=vmem, size = 0x30000, scoped, tag = 'input window, operand 2, single buffered']
    #allocation8 [shape = 'u8[32768]{0}', space=vmem, size = 0x8000, scoped, tag = 'input window, operand 3, single buffered']
    #allocation9 [shape = 's32[1]{0}', space=sflag, size = 0x4, scoped, tag = 'scoped memory for tpu_custom_call.1']
    #allocation10 [shape = 'u8[65536]{0}', space=vmem, size = 0x10000, scoped, tag = 'input window, operand 5, single buffered']
    #allocation11 [shape = 'u8[32768]{0}', space=vmem, size = 0x8000, scoped, tag = 'input window, operand 6, single buffered']
    #allocation12 [shape = 's32[1]{0}', space=sflag, size = 0x4, scoped, tag = 'scoped memory for tpu_custom_call.1']
    #allocation13 [shape = 'u8[16384]{0}', space=vmem, size = 0x4000, scoped, tag = 'output window, operand 0, single buffered']
    %12 = vsyncpa [#allocation3], 0
    %13 = vsyncpa [#allocation6], 0
    %14 = vsyncpa [#allocation9], 0
    %15 = vsyncpa [#allocation12], 0
    %16 = vsyncpa [#allocation4], 0
    // Predicated region
    $region2: #{tpu_custom_call.1} parent=1 // pred_check
      _
    $region3: #{tpu_custom_call.1} parent=1 // pred_check_branch
      %18 = sbr.rel (0) target = $region5
    $region4: #{tpu_custom_call.1} parent=1 // pred_region
      %s20 = ssub.s32 512, 512
      %21 = vsyncadd [#allocation3], %s20
      %s22 = sshll.u32 [#allocation2], 4
      %s23 = int_to_ptr.vmem [resolvable:$true] %s22
      %28 = dma.hbm_to_vmem [thread:$0]  %s0, 512, %s23, [#allocation3], 128, 128, 8
    $region5: #{tpu_custom_call.1} parent=1 // pred_fallthru
      _
    // Predicated region
    $region6: #{tpu_custom_call.1} parent=1 // pred_check
      _
    $region7: #{tpu_custom_call.1} parent=1 // pred_check_branch
      %30 = sbr.rel (0) target = $region9
    $region8: #{tpu_custom_call.1} parent=1 // pred_region
      %s32 = ssub.s32 3072, 3072
      %33 = vsyncadd [#allocation6], %s32
      %s34 = sshll.u32 [#allocation5], 4
      %s35 = int_to_ptr.vmem [resolvable:$true] %s34
      %40 = dma.hbm_to_vmem [thread:$0]  %s1, 3072, %s35, [#allocation6], 128, 128, 8
    $region9: #{tpu_custom_call.1} parent=1 // pred_fallthru
      _
    // Predicated region
    $region10: #{tpu_custom_call.1} parent=1 // pred_check
      _
    $region11: #{tpu_custom_call.1} parent=1 // pred_check_branch
      %42 = sbr.rel (0) target = $region13
    $region12: #{tpu_custom_call.1} parent=1 // pred_region
      %s44 = ssub.s32 6144, 6144
      %45 = vsyncadd [#allocation6], %s44
      %s46 = sshll.u32 [#allocation7], 4
      %s47 = int_to_ptr.vmem [resolvable:$true] %s46
      %52 = dma.hbm_to_vmem [thread:$0]  %s2, 6144, %s47, [#allocation6], 128, 128, 8
    $region13: #{tpu_custom_call.1} parent=1 // pred_fallthru
      _
    // Predicated region
    $region14: #{tpu_custom_call.1} parent=1 // pred_check
      _
    $region15: #{tpu_custom_call.1} parent=1 // pred_check_branch
      %54 = sbr.rel (0) target = $region17
    $region16: #{tpu_custom_call.1} parent=1 // pred_region
      %s56 = ssub.s32 1024, 1024
      %57 = vsyncadd [#allocation9], %s56
      %s58 = sshll.u32 [#allocation8], 4
      %s59 = int_to_ptr.vmem [resolvable:$true] %s58
      %64 = dma.hbm_to_vmem [thread:$0]  %s3, 1024, %s59, [#allocation9], 128, 128, 8
    $region17: #{tpu_custom_call.1} parent=1 // pred_fallthru
      _
    // Predicated region
    $region18: #{tpu_custom_call.1} parent=1 // pred_check
      _
    $region19: #{tpu_custom_call.1} parent=1 // pred_check_branch
      %66 = sbr.rel (0) target = $region21
    $region20: #{tpu_custom_call.1} parent=1 // pred_region
      _
    $region21: #{tpu_custom_call.1} parent=1 // pred_fallthru
      _
    // Predicated region
    $region22: #{tpu_custom_call.1} parent=1 // pred_check
      _
    $region23: #{tpu_custom_call.1} parent=1 // pred_check_branch
      %68 = sbr.rel (0) target = $region25
    $region24: #{tpu_custom_call.1} parent=1 // pred_region
      %s70 = ssub.s32 2048, 2048
      %71 = vsyncadd [#allocation9], %s70
      %s72 = sshll.u32 [#allocation10], 4
      %s73 = int_to_ptr.vmem [resolvable:$true] %s72
      %78 = dma.hbm_to_vmem [thread:$0]  %s5, 2048, %s73, [#allocation9], 128, 128, 8
    $region25: #{tpu_custom_call.1} parent=1 // pred_fallthru
      _
    // Predicated region
    $region26: #{tpu_custom_call.1} parent=1 // pred_check
      _
    $region27: #{tpu_custom_call.1} parent=1 // pred_check_branch
      %80 = sbr.rel (0) target = $region29
    $region28: #{tpu_custom_call.1} parent=1 // pred_region
      %s82 = ssub.s32 1024, 1024
      %83 = vsyncadd [#allocation12], %s82
      %s84 = sshll.u32 [#allocation11], 4
      %s85 = int_to_ptr.vmem [resolvable:$true] %s84
      %90 = dma.hbm_to_vmem [thread:$0]  %s6, 1024, %s85, [#allocation12], 128, 128, 8
    $region29: #{tpu_custom_call.1} parent=1 // pred_fallthru
      _
    // Predicated region
    $region30: #{tpu_custom_call.1} parent=1 // pred_check
      _
    $region31: #{tpu_custom_call.1} parent=1 // pred_check_branch
      %92 = sbr.rel (0) target = $region33
    $region32: #{tpu_custom_call.1} parent=1 // pred_region
      %93 = dma.done [#allocation3], 512
    $region33: #{tpu_custom_call.1} parent=1 // pred_fallthru
      _
    // Predicated region
    $region34: #{tpu_custom_call.1} parent=1 // pred_check
      _
    $region35: #{tpu_custom_call.1} parent=1 // pred_check_branch
      %95 = sbr.rel (0) target = $region37
    $region36: #{tpu_custom_call.1} parent=1 // pred_region
      %96 = dma.done [#allocation6], 3072
    $region37: #{tpu_custom_call.1} parent=1 // pred_fallthru
      _
    // Predicated region
    $region38: #{tpu_custom_call.1} parent=1 // pred_check
      _
    $region39: #{tpu_custom_call.1} parent=1 // pred_check_branch
      %98 = sbr.rel (0) target = $region41
    $region40: #{tpu_custom_call.1} parent=1 // pred_region
      %99 = dma.done [#allocation6], 6144
    $region41: #{tpu_custom_call.1} parent=1 // pred_fallthru
      _
    // Predicated region
    $region42: #{tpu_custom_call.1} parent=1 // pred_check
      _
    $region43: #{tpu_custom_call.1} parent=1 // pred_check_branch
      %101 = sbr.rel (0) target = $region45
    $region44: #{tpu_custom_call.1} parent=1 // pred_region
      %102 = dma.done [#allocation9], 1024
    $region45: #{tpu_custom_call.1} parent=1 // pred_fallthru
      _
    // Predicated region
    $region46: #{tpu_custom_call.1} parent=1 // pred_check
      _
    $region47: #{tpu_custom_call.1} parent=1 // pred_check_branch
      %104 = sbr.rel (0) target = $region49
    $region48: #{tpu_custom_call.1} parent=1 // pred_region
      %105 = dma.done [#allocation9], 2048
    $region49: #{tpu_custom_call.1} parent=1 // pred_fallthru
      _
    // Predicated region
    $region50: #{tpu_custom_call.1} parent=1 // pred_check
      _
    $region51: #{tpu_custom_call.1} parent=1 // pred_check_branch
      %107 = sbr.rel (0) target = $region53
    $region52: #{tpu_custom_call.1} parent=1 // pred_region
      %108 = dma.done [#allocation12], 1024
    $region53: #{tpu_custom_call.1} parent=1 // pred_fallthru
      _
    %v109 = vld [vmem:[#allocation2] sm:$0xff]
    %v110 = vld [vmem:[#allocation2 + $0x8] sm:$0xff]
    %v111 = vld [vmem:[#allocation2 + $0x10] sm:$0xff]
    %v112 = vld [vmem:[#allocation2 + $0x18] sm:$0xff]
    %v113 = vld [vmem:[#allocation10] sm:$0xff]
    %v114 = vld [vmem:[#allocation10 + $0x8] sm:$0xff]
    %v115 = vld [vmem:[#allocation10 + $0x10] sm:$0xff]
    %v116 = vld [vmem:[#allocation10 + $0x18] sm:$0xff]
    %v117 = vld [vmem:[#allocation10 + $0x20] sm:$0xff]
    %v118 = vld [vmem:[#allocation10 + $0x28] sm:$0xff]
    %v119 = vld [vmem:[#allocation10 + $0x30] sm:$0xff]
    %v120 = vld [vmem:[#allocation10 + $0x38] sm:$0xff]
    %v121 = vld [vmem:[#allocation10 + $0x40] sm:$0xff]
    %v122 = vld [vmem:[#allocation10 + $0x48] sm:$0xff]
    %v123 = vld [vmem:[#allocation10 + $0x50] sm:$0xff]
    %v124 = vld [vmem:[#allocation10 + $0x58] sm:$0xff]
    %v125 = vld [vmem:[#allocation10 + $0x60] sm:$0xff]
    %v126 = vld [vmem:[#allocation10 + $0x68] sm:$0xff]
    %v127 = vld [vmem:[#allocation10 + $0x70] sm:$0xff]
    %v128 = vld [vmem:[#allocation10 + $0x78] sm:$0xff]
    %v129 = vld [vmem:[%s4] sm:$0x3f]
    %v130 = vld [vmem:[#allocation11] sm:$0xff]
    %v131 = vld [vmem:[#allocation11 + $0x8] sm:$0xff]
    %v132 = vld [vmem:[#allocation11 + $0x10] sm:$0xff]
    %v133 = vld [vmem:[#allocation11 + $0x18] sm:$0xff]
    %s134 = scalar_lea.vmem [#allocation11], 32
    %v135 = vld [vmem:[%s134] sm:$0xff]
    %v136 = vld [vmem:[%s134 + $0x8] sm:$0xff]
    %v137 = vld [vmem:[%s134 + $0x10] sm:$0xff]
    %v138 = vld [vmem:[%s134 + $0x18] sm:$0xff]
    %vm139 = vcmask 261120
    %v141 = vsel %vm139, %v130, 0
    %v144 = vsel %vm139, %v131, 0
    %v147 = vsel %vm139, %v132, 0
    %v150 = vsel %vm139, %v133, 0
    %152 = vmatprep.subr.mxu0 0.0
    %153 = vmatpush1.msra.mxu0 %v109
    %154 = vmatprep.subr.mxu0 0.0
    %155 = vmatpush1.msra.mxu0 %v110
    %156 = vmatprep.subr.mxu0 0.0
    %157 = vmatpush1.msra.mxu0 %v111
    %158 = vmatprep.subr.mxu0 0.0
    %159 = vmatpush1.msra.mxu0 %v112
    %160 = vmatprep.subr.mxu0 0.0
    %161 = vmatpush1.msra.mxu0 0.0
    %162 = vmatprep.subr.mxu0 0.0
    %163 = vmatpush1.msra.mxu0 0.0
    %164 = vmatprep.subr.mxu0 0.0
    %165 = vmatpush1.msra.mxu0 0.0
    %166 = vmatprep.subr.mxu0 0.0
    %167 = vmatpush1.msra.mxu0 0.0
    %168 = vmatprep.subr.mxu0 0.0
    %169 = vmatpush1.msra.mxu0 0.0
    %170 = vmatprep.subr.mxu0 0.0
    %171 = vmatpush1.msra.mxu0 0.0
    %172 = vmatprep.subr.mxu0 0.0
    %173 = vmatpush1.msra.mxu0 0.0
    %174 = vmatprep.subr.mxu0 0.0
    %175 = vmatpush1.msra.mxu0 0.0
    %176 = vmatprep.subr.mxu0 0.0
    %177 = vmatpush1.msra.mxu0 0.0
    %178 = vmatprep.subr.mxu0 0.0
    %179 = vmatpush1.msra.mxu0 0.0
    %180 = vmatprep.subr.mxu0 0.0
    %181 = vmatpush1.msra.mxu0 0.0
    %182 = vmatprep.subr.mxu0 0.0
    %183 = vmatpush1.msra.mxu0 0.0
    %184 = vmatprep.subr.mxu0 0.0
    %185 = vmatpush1.msra.mxu0 0.0
    %186 = vmatprep.subr.mxu0 0.0
    %187 = vmatpush1.msra.mxu0 0.0
    %188 = vmatprep.subr.mxu0 0.0
    %189 = vmatpush1.msra.mxu0 0.0
    %190 = vmatprep.subr.mxu0 0.0
    %191 = vmatpush1.msra.mxu0 0.0
    %192 = vmatprep.subr.mxu0 0.0
    %193 = vmatpush1.msra.mxu0 0.0
    %194 = vmatprep.subr.mxu0 0.0
    %195 = vmatpush1.msra.mxu0 0.0
    %196 = vmatprep.subr.mxu0 0.0
    %197 = vmatpush1.msra.mxu0 0.0
    %198 = vmatprep.subr.mxu0 0.0
    %199 = vmatpush1.msra.mxu0 0.0
    %200 = vmatprep.subr.mxu0 0.0
    %201 = vmatpush1.msra.mxu0 0.0
    %202 = vmatprep.subr.mxu0 0.0
    %203 = vmatpush1.msra.mxu0 0.0
    %204 = vmatprep.subr.mxu0 0.0
    %205 = vmatpush1.msra.mxu0 0.0
    %206 = vmatprep.subr.mxu0 0.0
    %207 = vmatpush1.msra.mxu0 0.0
    %208 = vmatprep.subr.mxu0 0.0
    %209 = vmatpush1.msra.mxu0 0.0
    %210 = vmatprep.subr.mxu0 0.0
    %211 = vmatpush1.msra.mxu0 0.0
    %212 = vmatprep.subr.mxu0 0.0
    %213 = vmatpush1.msra.mxu0 0.0
    %214 = vmatprep.subr.mxu0 0.0
    %215 = vmatpush1.msra.mxu0 0.0
    %216 = vmatprep.mubr.f32.mxu0 0.0
    %217 = vmatmul.mubr.f32.gmra.mrb[0].mxu0 %v141
    %v218 = vpop.f32.mrb[0].mxu0
    %v219 = vadd.f32 0.0, %v218
    %v220 = vpop.f32.mrb[0].mxu0
    %221 = vmatprep.mubr.f32.mxu0 0.0
    %222 = vmatmul.mubr.f32.gmra.mrb[0].mxu0 %v144
    %v223 = vpop.f32.mrb[0].mxu0
    %v224 = vadd.f32 0.0, %v223
    %v225 = vpop.f32.mrb[0].mxu0
    %226 = vmatprep.mubr.f32.mxu0 0.0
    %227 = vmatmul.mubr.f32.gmra.mrb[0].mxu0 %v147
    %v228 = vpop.f32.mrb[0].mxu0
    %v229 = vadd.f32 0.0, %v228
    %v230 = vpop.f32.mrb[0].mxu0
    %231 = vmatprep.mubr.f32.mxu0 0.0
    %232 = vmatmul.mubr.f32.gmra.mrb[0].mxu0 %v150
    %v233 = vpop.f32.mrb[0].mxu0
    %v234 = vadd.f32 0.0, %v233
    %v235 = vpop.f32.mrb[0].mxu0
    %236 = vdwg.mxu0
    %v238 = vsel %vm139, %v135, 0
    %v241 = vsel %vm139, %v136, 0
    %v244 = vsel %vm139, %v137, 0
    %v247 = vsel %vm139, %v138, 0
    %249 = vmatprep.subr.mxu0 0.0
    %250 = vmatpush1.msra.mxu0 %v109
    %251 = vmatprep.subr.mxu0 0.0
    %252 = vmatpush1.msra.mxu0 %v110
    %253 = vmatprep.subr.mxu0 0.0
    %254 = vmatpush1.msra.mxu0 %v111
    %255 = vmatprep.subr.mxu0 0.0
    %256 = vmatpush1.msra.mxu0 %v112
    %257 = vmatprep.subr.mxu0 0.0
    %258 = vmatpush1.msra.mxu0 0.0
    %259 = vmatprep.subr.mxu0 0.0
    %260 = vmatpush1.msra.mxu0 0.0
    %261 = vmatprep.subr.mxu0 0.0
    %262 = vmatpush1.msra.mxu0 0.0
    %263 = vmatprep.subr.mxu0 0.0
    %264 = vmatpush1.msra.mxu0 0.0
    %265 = vmatprep.subr.mxu0 0.0
    %266 = vmatpush1.msra.mxu0 0.0
    %267 = vmatprep.subr.mxu0 0.0
    %268 = vmatpush1.msra.mxu0 0.0
    %269 = vmatprep.subr.mxu0 0.0
    %270 = vmatpush1.msra.mxu0 0.0
    %271 = vmatprep.subr.mxu0 0.0
    %272 = vmatpush1.msra.mxu0 0.0
    %273 = vmatprep.subr.mxu0 0.0
    %274 = vmatpush1.msra.mxu0 0.0
    %275 = vmatprep.subr.mxu0 0.0
    %276 = vmatpush1.msra.mxu0 0.0
    %277 = vmatprep.subr.mxu0 0.0
    %278 = vmatpush1.msra.mxu0 0.0
    %279 = vmatprep.subr.mxu0 0.0
    %280 = vmatpush1.msra.mxu0 0.0
    %281 = vmatprep.subr.mxu0 0.0
    %282 = vmatpush1.msra.mxu0 0.0
    %283 = vmatprep.subr.mxu0 0.0
    %284 = vmatpush1.msra.mxu0 0.0
    %285 = vmatprep.subr.mxu0 0.0
    %286 = vmatpush1.msra.mxu0 0.0
    %287 = vmatprep.subr.mxu0 0.0
    %288 = vmatpush1.msra.mxu0 0.0
    %289 = vmatprep.subr.mxu0 0.0
    %290 = vmatpush1.msra.mxu0 0.0
    %291 = vmatprep.subr.mxu0 0.0
    %292 = vmatpush1.msra.mxu0 0.0
    %293 = vmatprep.subr.mxu0 0.0
    %294 = vmatpush1.msra.mxu0 0.0
    %295 = vmatprep.subr.mxu0 0.0
    %296 = vmatpush1.msra.mxu0 0.0
    %297 = vmatprep.subr.mxu0 0.0
    %298 = vmatpush1.msra.mxu0 0.0
    %299 = vmatprep.subr.mxu0 0.0
    %300 = vmatpush1.msra.mxu0 0.0
    %301 = vmatprep.subr.mxu0 0.0
    %302 = vmatpush1.msra.mxu0 0.0
    %303 = vmatprep.subr.mxu0 0.0
    %304 = vmatpush1.msra.mxu0 0.0
    %305 = vmatprep.subr.mxu0 0.0
    %306 = vmatpush1.msra.mxu0 0.0
    %307 = vmatprep.subr.mxu0 0.0
    %308 = vmatpush1.msra.mxu0 0.0
    %309 = vmatprep.subr.mxu0 0.0
    %310 = vmatpush1.msra.mxu0 0.0
    %311 = vmatprep.subr.mxu0 0.0
    %312 = vmatpush1.msra.mxu0 0.0
    %313 = vmatprep.mubr.f32.mxu0 0.0
    %314 = vmatmul.mubr.f32.gmra.mrb[0].mxu0 %v238
    %v315 = vpop.f32.mrb[0].mxu0
    %v316 = vadd.f32 0.0, %v315
    %v317 = vpop.f32.mrb[0].mxu0
    %318 = vmatprep.mubr.f32.mxu0 0.0
    %319 = vmatmul.mubr.f32.gmra.mrb[0].mxu0 %v241
    %v320 = vpop.f32.mrb[0].mxu0
    %v321 = vadd.f32 0.0, %v320
    %v322 = vpop.f32.mrb[0].mxu0
    %323 = vmatprep.mubr.f32.mxu0 0.0
    %324 = vmatmul.mubr.f32.gmra.mrb[0].mxu0 %v244
    %v325 = vpop.f32.mrb[0].mxu0
    %v326 = vadd.f32 0.0, %v325
    %v327 = vpop.f32.mrb[0].mxu0
    %328 = vmatprep.mubr.f32.mxu0 0.0
    %329 = vmatmul.mubr.f32.gmra.mrb[0].mxu0 %v247
    %v330 = vpop.f32.mrb[0].mxu0
    %v331 = vadd.f32 0.0, %v330
    %v332 = vpop.f32.mrb[0].mxu0
    %333 = vdwg.mxu0
    %v334 = vld [vmem:[#allocation5] sm:$0xff]
    %v335 = vld [vmem:[#allocation5 + $0x8] sm:$0xff]
    %v336 = vld [vmem:[#allocation5 + $0x10] sm:$0xff]
    %v337 = vld [vmem:[#allocation5 + $0x18] sm:$0xff]
    %v338 = vld [vmem:[#allocation5 + $0x20] sm:$0xff]
    %v339 = vld [vmem:[#allocation5 + $0x28] sm:$0xff]
    %v340 = vld [vmem:[#allocation5 + $0x30] sm:$0xff]
    %v341 = vld [vmem:[#allocation5 + $0x38] sm:$0xff]
    %s342 = scalar_lea.vmem [#allocation5], 64
    %v343 = vld [vmem:[%s342] sm:$0xff]
    %v344 = vld [vmem:[%s342 + $0x8] sm:$0xff]
    %v345 = vld [vmem:[%s342 + $0x10] sm:$0xff]
    %v346 = vld [vmem:[%s342 + $0x18] sm:$0xff]
    %v347 = vld [vmem:[%s342 + $0x20] sm:$0xff]
    %v348 = vld [vmem:[%s342 + $0x28] sm:$0xff]
    %v349 = vld [vmem:[%s342 + $0x30] sm:$0xff]
    %v350 = vld [vmem:[%s342 + $0x38] sm:$0xff]
    %vm351 = vcmask 523264
    %v353 = vsel %vm351, %v109, 0
    %v356 = vsel %vm351, %v110, 0
    %v359 = vsel %vm351, %v111, 0
    %v362 = vsel %vm351, %v112, 0
    %364 = vmatprep.subr.mxu0 0.0
    %365 = vmatpush1.msra.mxu0 %v343
    %366 = vmatprep.subr.mxu0 0.0
    %367 = vmatpush1.msra.mxu0 %v344
    %368 = vmatprep.subr.mxu0 0.0
    %369 = vmatpush1.msra.mxu0 %v345
    %370 = vmatprep.subr.mxu0 0.0
    %371 = vmatpush1.msra.mxu0 %v346
    %372 = vmatprep.subr.mxu0 0.0
    %373 = vmatpush1.msra.mxu0 %v347
    %374 = vmatprep.subr.mxu0 0.0
    %375 = vmatpush1.msra.mxu0 %v348
    %376 = vmatprep.subr.mxu0 0.0
    %377 = vmatpush1.msra.mxu0 %v349
    %378 = vmatprep.subr.mxu0 0.0
    %379 = vmatpush1.msra.mxu0 %v350
    %380 = vmatprep.subr.mxu0 0.0
    %381 = vmatpush1.msra.mxu0 0.0
    %382 = vmatprep.subr.mxu0 0.0
    %383 = vmatpush1.msra.mxu0 0.0
    %384 = vmatprep.subr.mxu0 0.0
    %385 = vmatpush1.msra.mxu0 0.0
    %386 = vmatprep.subr.mxu0 0.0
    %387 = vmatpush1.msra.mxu0 0.0
    %388 = vmatprep.subr.mxu0 0.0
    %389 = vmatpush1.msra.mxu0 0.0
    %390 = vmatprep.subr.mxu0 0.0
    %391 = vmatpush1.msra.mxu0 0.0
    %392 = vmatprep.subr.mxu0 0.0
    %393 = vmatpush1.msra.mxu0 0.0
    %394 = vmatprep.subr.mxu0 0.0
    %395 = vmatpush1.msra.mxu0 0.0
    %396 = vmatprep.subr.mxu0 0.0
    %397 = vmatpush1.msra.mxu0 0.0
    %398 = vmatprep.subr.mxu0 0.0
    %399 = vmatpush1.msra.mxu0 0.0
    %400 = vmatprep.subr.mxu0 0.0
    %401 = vmatpush1.msra.mxu0 0.0
    %402 = vmatprep.subr.mxu0 0.0
    %403 = vmatpush1.msra.mxu0 0.0
    %404 = vmatprep.subr.mxu0 0.0
    %405 = vmatpush1.msra.mxu0 0.0
    %406 = vmatprep.subr.mxu0 0.0
    %407 = vmatpush1.msra.mxu0 0.0
    %408 = vmatprep.subr.mxu0 0.0
    %409 = vmatpush1.msra.mxu0 0.0
    %410 = vmatprep.subr.mxu0 0.0
    %411 = vmatpush1.msra.mxu0 0.0
    %412 = vmatprep.subr.mxu0 0.0
    %413 = vmatpush1.msra.mxu0 0.0
    %414 = vmatprep.subr.mxu0 0.0
    %415 = vmatpush1.msra.mxu0 0.0
    %416 = vmatprep.subr.mxu0 0.0
    %417 = vmatpush1.msra.mxu0 0.0
    %418 = vmatprep.subr.mxu0 0.0
    %419 = vmatpush1.msra.mxu0 0.0
    %420 = vmatprep.subr.mxu0 0.0
    %421 = vmatpush1.msra.mxu0 0.0
    %422 = vmatprep.subr.mxu0 0.0
    %423 = vmatpush1.msra.mxu0 0.0
    %424 = vmatprep.subr.mxu0 0.0
    %425 = vmatpush1.msra.mxu0 0.0
    %426 = vmatprep.subr.mxu0 0.0
    %427 = vmatpush1.msra.mxu0 0.0
    %428 = vmatprep.mubr.f32.mxu0 0.0
    %429 = vmatmul.mubr.f32.gmra.mrb[0].mxu0 %v353
    %v430 = vpop.f32.mrb[0].mxu0
    %v431 = vadd.f32 0.0, %v430
    %v432 = vpop.f32.mrb[0].mxu0
    %433 = vmatprep.mubr.f32.mxu0 0.0
    %434 = vmatmul.mubr.f32.gmra.mrb[0].mxu0 %v356
    %v435 = vpop.f32.mrb[0].mxu0
    %v436 = vadd.f32 0.0, %v435
    %v437 = vpop.f32.mrb[0].mxu0
    %438 = vmatprep.mubr.f32.mxu0 0.0
    %439 = vmatmul.mubr.f32.gmra.mrb[0].mxu0 %v359
    %v440 = vpop.f32.mrb[0].mxu0
    %v441 = vadd.f32 0.0, %v440
    %v442 = vpop.f32.mrb[0].mxu0
    %443 = vmatprep.mubr.f32.mxu0 0.0
    %444 = vmatmul.mubr.f32.gmra.mrb[0].mxu0 %v362
    %v445 = vpop.f32.mrb[0].mxu0
    %v446 = vadd.f32 0.0, %v445
    %v447 = vpop.f32.mrb[0].mxu0
    %448 = vdwg.mxu0
    %v450 = vsel %vm351, %v219, 0
    %v453 = vsel %vm351, %v224, 0
    %v456 = vsel %vm351, %v229, 0
    %v459 = vsel %vm351, %v234, 0
    %461 = vmatprep.subr.mxu0 0.0
    %462 = vmatpush1.msra.mxu0 %v334
    %463 = vmatprep.subr.mxu0 0.0
    %464 = vmatpush1.msra.mxu0 %v335
    %465 = vmatprep.subr.mxu0 0.0
    %466 = vmatpush1.msra.mxu0 %v336
    %467 = vmatprep.subr.mxu0 0.0
    %468 = vmatpush1.msra.mxu0 %v337
    %469 = vmatprep.subr.mxu0 0.0
    %470 = vmatpush1.msra.mxu0 %v338
    %471 = vmatprep.subr.mxu0 0.0
    %472 = vmatpush1.msra.mxu0 %v339
    %473 = vmatprep.subr.mxu0 0.0
    %474 = vmatpush1.msra.mxu0 %v340
    %475 = vmatprep.subr.mxu0 0.0
    %476 = vmatpush1.msra.mxu0 %v341
    %477 = vmatprep.subr.mxu0 0.0
    %478 = vmatpush1.msra.mxu0 0.0
    %479 = vmatprep.subr.mxu0 0.0
    %480 = vmatpush1.msra.mxu0 0.0
    %481 = vmatprep.subr.mxu0 0.0
    %482 = vmatpush1.msra.mxu0 0.0
    %483 = vmatprep.subr.mxu0 0.0
    %484 = vmatpush1.msra.mxu0 0.0
    %485 = vmatprep.subr.mxu0 0.0
    %486 = vmatpush1.msra.mxu0 0.0
    %487 = vmatprep.subr.mxu0 0.0
    %488 = vmatpush1.msra.mxu0 0.0
    %489 = vmatprep.subr.mxu0 0.0
    %490 = vmatpush1.msra.mxu0 0.0
    %491 = vmatprep.subr.mxu0 0.0
    %492 = vmatpush1.msra.mxu0 0.0
    %493 = vmatprep.subr.mxu0 0.0
    %494 = vmatpush1.msra.mxu0 0.0
    %495 = vmatprep.subr.mxu0 0.0
    %496 = vmatpush1.msra.mxu0 0.0
    %497 = vmatprep.subr.mxu0 0.0
    %498 = vmatpush1.msra.mxu0 0.0
    %499 = vmatprep.subr.mxu0 0.0
    %500 = vmatpush1.msra.mxu0 0.0
    %501 = vmatprep.subr.mxu0 0.0
    %502 = vmatpush1.msra.mxu0 0.0
    %503 = vmatprep.subr.mxu0 0.0
    %504 = vmatpush1.msra.mxu0 0.0
    %505 = vmatprep.subr.mxu0 0.0
    %506 = vmatpush1.msra.mxu0 0.0
    %507 = vmatprep.subr.mxu0 0.0
    %508 = vmatpush1.msra.mxu0 0.0
    %509 = vmatprep.subr.mxu0 0.0
    %510 = vmatpush1.msra.mxu0 0.0
    %511 = vmatprep.subr.mxu0 0.0
    %512 = vmatpush1.msra.mxu0 0.0
    %513 = vmatprep.subr.mxu0 0.0
    %514 = vmatpush1.msra.mxu0 0.0
    %515 = vmatprep.subr.mxu0 0.0
    %516 = vmatpush1.msra.mxu0 0.0
    %517 = vmatprep.subr.mxu0 0.0
    %518 = vmatpush1.msra.mxu0 0.0
    %519 = vmatprep.subr.mxu0 0.0
    %520 = vmatpush1.msra.mxu0 0.0
    %521 = vmatprep.subr.mxu0 0.0
    %522 = vmatpush1.msra.mxu0 0.0
    %523 = vmatprep.subr.mxu0 0.0
    %524 = vmatpush1.msra.mxu0 0.0
    %525 = vmatprep.mubr.f32.mxu0 0.0
    %526 = vmatmul.mubr.f32.gmra.mrb[0].mxu0 %v450
    %v527 = vpop.f32.mrb[0].mxu0
    %v528 = vadd.f32 %v431, %v527
    %v529 = vpop.f32.mrb[0].mxu0
    %530 = vmatprep.mubr.f32.mxu0 0.0
    %531 = vmatmul.mubr.f32.gmra.mrb[0].mxu0 %v453
    %v532 = vpop.f32.mrb[0].mxu0
    %v533 = vadd.f32 %v436, %v532
    %v534 = vpop.f32.mrb[0].mxu0
    %535 = vmatprep.mubr.f32.mxu0 0.0
    %536 = vmatmul.mubr.f32.gmra.mrb[0].mxu0 %v456
    %v537 = vpop.f32.mrb[0].mxu0
    %v538 = vadd.f32 %v441, %v537
    %v539 = vpop.f32.mrb[0].mxu0
    %540 = vmatprep.mubr.f32.mxu0 0.0
    %541 = vmatmul.mubr.f32.gmra.mrb[0].mxu0 %v459
    %v542 = vpop.f32.mrb[0].mxu0
    %v543 = vadd.f32 %v446, %v542
    %v544 = vpop.f32.mrb[0].mxu0
    %545 = vdwg.mxu0
    %s546 = scalar_lea.vmem [#allocation5], 128
    %v547 = vld [vmem:[%s546] sm:$0xff]
    %v548 = vld [vmem:[%s546 + $0x8] sm:$0xff]
    %v549 = vld [vmem:[%s546 + $0x10] sm:$0xff]
    %v550 = vld [vmem:[%s546 + $0x18] sm:$0xff]
    %v551 = vld [vmem:[%s546 + $0x20] sm:$0xff]
    %v552 = vld [vmem:[%s546 + $0x28] sm:$0xff]
    %v553 = vld [vmem:[%s546 + $0x30] sm:$0xff]
    %v554 = vld [vmem:[%s546 + $0x38] sm:$0xff]
    %v556 = vsel %vm351, %v316, 0
    %v559 = vsel %vm351, %v321, 0
    %v562 = vsel %vm351, %v326, 0
    %v565 = vsel %vm351, %v331, 0
    %567 = vmatprep.subr.mxu0 0.0
    %568 = vmatpush1.msra.mxu0 %v547
    %569 = vmatprep.subr.mxu0 0.0
    %570 = vmatpush1.msra.mxu0 %v548
    %571 = vmatprep.subr.mxu0 0.0
    %572 = vmatpush1.msra.mxu0 %v549
    %573 = vmatprep.subr.mxu0 0.0
    %574 = vmatpush1.msra.mxu0 %v550
    %575 = vmatprep.subr.mxu0 0.0
    %576 = vmatpush1.msra.mxu0 %v551
    %577 = vmatprep.subr.mxu0 0.0
    %578 = vmatpush1.msra.mxu0 %v552
    %579 = vmatprep.subr.mxu0 0.0
    %580 = vmatpush1.msra.mxu0 %v553
    %581 = vmatprep.subr.mxu0 0.0
    %582 = vmatpush1.msra.mxu0 %v554
    %583 = vmatprep.subr.mxu0 0.0
    %584 = vmatpush1.msra.mxu0 0.0
    %585 = vmatprep.subr.mxu0 0.0
    %586 = vmatpush1.msra.mxu0 0.0
    %587 = vmatprep.subr.mxu0 0.0
    %588 = vmatpush1.msra.mxu0 0.0
    %589 = vmatprep.subr.mxu0 0.0
    %590 = vmatpush1.msra.mxu0 0.0
    %591 = vmatprep.subr.mxu0 0.0
    %592 = vmatpush1.msra.mxu0 0.0
    %593 = vmatprep.subr.mxu0 0.0
    %594 = vmatpush1.msra.mxu0 0.0
    %595 = vmatprep.subr.mxu0 0.0
    %596 = vmatpush1.msra.mxu0 0.0
    %597 = vmatprep.subr.mxu0 0.0
    %598 = vmatpush1.msra.mxu0 0.0
    %599 = vmatprep.subr.mxu0 0.0
    %600 = vmatpush1.msra.mxu0 0.0
    %601 = vmatprep.subr.mxu0 0.0
    %602 = vmatpush1.msra.mxu0 0.0
    %603 = vmatprep.subr.mxu0 0.0
    %604 = vmatpush1.msra.mxu0 0.0
    %605 = vmatprep.subr.mxu0 0.0
    %606 = vmatpush1.msra.mxu0 0.0
    %607 = vmatprep.subr.mxu0 0.0
    %608 = vmatpush1.msra.mxu0 0.0
    %609 = vmatprep.subr.mxu0 0.0
    %610 = vmatpush1.msra.mxu0 0.0
    %611 = vmatprep.subr.mxu0 0.0
    %612 = vmatpush1.msra.mxu0 0.0
    %613 = vmatprep.subr.mxu0 0.0
    %614 = vmatpush1.msra.mxu0 0.0
    %615 = vmatprep.subr.mxu0 0.0
    %616 = vmatpush1.msra.mxu0 0.0
    %617 = vmatprep.subr.mxu0 0.0
    %618 = vmatpush1.msra.mxu0 0.0
    %619 = vmatprep.subr.mxu0 0.0
    %620 = vmatpush1.msra.mxu0 0.0
    %621 = vmatprep.subr.mxu0 0.0
    %622 = vmatpush1.msra.mxu0 0.0
    %623 = vmatprep.subr.mxu0 0.0
    %624 = vmatpush1.msra.mxu0 0.0
    %625 = vmatprep.subr.mxu0 0.0
    %626 = vmatpush1.msra.mxu0 0.0
    %627 = vmatprep.subr.mxu0 0.0
    %628 = vmatpush1.msra.mxu0 0.0
    %629 = vmatprep.subr.mxu0 0.0
    %630 = vmatpush1.msra.mxu0 0.0
    %631 = vmatprep.mubr.f32.mxu0 0.0
    %632 = vmatmul.mubr.f32.gmra.mrb[0].mxu0 %v556
    %v633 = vpop.f32.mrb[0].mxu0
    %v634 = vadd.f32 0.0, %v633
    %v635 = vpop.f32.mrb[0].mxu0
    %636 = vmatprep.mubr.f32.mxu0 0.0
    %637 = vmatmul.mubr.f32.gmra.mrb[0].mxu0 %v559
    %v638 = vpop.f32.mrb[0].mxu0
    %v639 = vadd.f32 0.0, %v638
    %v640 = vpop.f32.mrb[0].mxu0
    %641 = vmatprep.mubr.f32.mxu0 0.0
    %642 = vmatmul.mubr.f32.gmra.mrb[0].mxu0 %v562
    %v643 = vpop.f32.mrb[0].mxu0
    %v644 = vadd.f32 0.0, %v643
    %v645 = vpop.f32.mrb[0].mxu0
    %646 = vmatprep.mubr.f32.mxu0 0.0
    %647 = vmatmul.mubr.f32.gmra.mrb[0].mxu0 %v565
    %v648 = vpop.f32.mrb[0].mxu0
    %v649 = vadd.f32 0.0, %v648
    %v650 = vpop.f32.mrb[0].mxu0
    %651 = vdwg.mxu0
    %v652 = vadd.f32 %v528, %v634
    %v653 = vadd.f32 %v533, %v639
    %v654 = vadd.f32 %v538, %v644
    %v655 = vadd.f32 %v543, %v649
    %v656 = vadd.f32 %v652, %v653
    %v657 = vadd.f32 %v656, %v654
    %v658 = vadd.f32 %v657, %v655
    %v659 = vrot.slane %v658, 4
    %v660 = vadd.f32 %v658, %v659
    %v661 = vrot.slane %v660, 2
    %v662 = vadd.f32 %v660, %v661
    %v663 = vrot.slane %v662, 1
    %v664 = vadd.f32 %v662, %v663
    %v665 = vmul.f32 %v652, %v652
    %v666 = vmul.f32 %v653, %v653
    %v667 = vmul.f32 %v654, %v654
    %v668 = vmul.f32 %v655, %v655
    %v669 = vadd.f32 %v665, %v666
    %v670 = vadd.f32 %v669, %v667
    %v671 = vadd.f32 %v670, %v668
    %v672 = vrot.slane %v671, 4
    %v673 = vadd.f32 %v671, %v672
    %v674 = vrot.slane %v673, 2
    %v675 = vadd.f32 %v673, %v674
    %v676 = vrot.slane %v675, 1
    %v677 = vadd.f32 %v675, %v676
    %678 = vmatprep.subr.mxu0 0.0
    %679 = vmatpush1.msra.mxu0 %v113
    %680 = vmatprep.subr.mxu0 0.0
    %681 = vmatpush1.msra.mxu0 %v114
    %682 = vmatprep.subr.mxu0 0.0
    %683 = vmatpush1.msra.mxu0 %v115
    %684 = vmatprep.subr.mxu0 0.0
    %685 = vmatpush1.msra.mxu0 %v116
    %686 = vmatprep.subr.mxu0 0.0
    %687 = vmatpush1.msra.mxu0 %v117
    %688 = vmatprep.subr.mxu0 0.0
    %689 = vmatpush1.msra.mxu0 %v118
    %690 = vmatprep.subr.mxu0 0.0
    %691 = vmatpush1.msra.mxu0 %v119
    %692 = vmatprep.subr.mxu0 0.0
    %693 = vmatpush1.msra.mxu0 %v120
    %694 = vmatprep.subr.mxu0 0.0
    %695 = vmatpush1.msra.mxu0 %v121
    %696 = vmatprep.subr.mxu0 0.0
    %697 = vmatpush1.msra.mxu0 %v122
    %698 = vmatprep.subr.mxu0 0.0
    %699 = vmatpush1.msra.mxu0 %v123
    %700 = vmatprep.subr.mxu0 0.0
    %701 = vmatpush1.msra.mxu0 %v124
    %702 = vmatprep.subr.mxu0 0.0
    %703 = vmatpush1.msra.mxu0 %v125
    %704 = vmatprep.subr.mxu0 0.0
    %705 = vmatpush1.msra.mxu0 %v126
    %706 = vmatprep.subr.mxu0 0.0
    %707 = vmatpush1.msra.mxu0 %v127
    %708 = vmatprep.subr.mxu0 0.0
    %709 = vmatpush1.msra.mxu0 %v128
    %710 = vmatprep.subr.mxu0 0.0
    %711 = vmatpush1.msra.mxu0 0.0
    %712 = vmatprep.subr.mxu0 0.0
    %713 = vmatpush1.msra.mxu0 0.0
    %714 = vmatprep.subr.mxu0 0.0
    %715 = vmatpush1.msra.mxu0 0.0
    %716 = vmatprep.subr.mxu0 0.0
    %717 = vmatpush1.msra.mxu0 0.0
    %718 = vmatprep.subr.mxu0 0.0
    %719 = vmatpush1.msra.mxu0 0.0
    %720 = vmatprep.subr.mxu0 0.0
    %721 = vmatpush1.msra.mxu0 0.0
    %722 = vmatprep.subr.mxu0 0.0
    %723 = vmatpush1.msra.mxu0 0.0
    %724 = vmatprep.subr.mxu0 0.0
    %725 = vmatpush1.msra.mxu0 0.0
    %726 = vmatprep.subr.mxu0 0.0
    %727 = vmatpush1.msra.mxu0 0.0
    %728 = vmatprep.subr.mxu0 0.0
    %729 = vmatpush1.msra.mxu0 0.0
    %730 = vmatprep.subr.mxu0 0.0
    %731 = vmatpush1.msra.mxu0 0.0
    %732 = vmatprep.subr.mxu0 0.0
    %733 = vmatpush1.msra.mxu0 0.0
    %734 = vmatprep.subr.mxu0 0.0
    %735 = vmatpush1.msra.mxu0 0.0
    %736 = vmatprep.subr.mxu0 0.0
    %737 = vmatpush1.msra.mxu0 0.0
    %738 = vmatprep.subr.mxu0 0.0
    %739 = vmatpush1.msra.mxu0 0.0
    %740 = vmatprep.subr.mxu0 0.0
    %741 = vmatpush1.msra.mxu0 0.0
    %742 = vmatprep.mubr.f32.mxu0 0.0
    %743 = vmatmul.mubr.f32.gmra.mrb[0].mxu0 %v664
    %v744 = vpop.f32.mrb[0].mxu0
    %v745 = vadd.f32 0.0, %v744
    %v746 = vpop.f32.mrb[0].mxu0
    %747 = vdwg.mxu0
    %748 = vmatprep.subr.mxu0 0.0
    %749 = vmatpush1.msra.mxu0 %v113
    %750 = vmatprep.subr.mxu0 0.0
    %751 = vmatpush1.msra.mxu0 %v114
    %752 = vmatprep.subr.mxu0 0.0
    %753 = vmatpush1.msra.mxu0 %v115
    %754 = vmatprep.subr.mxu0 0.0
    %755 = vmatpush1.msra.mxu0 %v116
    %756 = vmatprep.subr.mxu0 0.0
    %757 = vmatpush1.msra.mxu0 %v117
    %758 = vmatprep.subr.mxu0 0.0
    %759 = vmatpush1.msra.mxu0 %v118
    %760 = vmatprep.subr.mxu0 0.0
    %761 = vmatpush1.msra.mxu0 %v119
    %762 = vmatprep.subr.mxu0 0.0
    %763 = vmatpush1.msra.mxu0 %v120
    %764 = vmatprep.subr.mxu0 0.0
    %765 = vmatpush1.msra.mxu0 %v121
    %766 = vmatprep.subr.mxu0 0.0
    %767 = vmatpush1.msra.mxu0 %v122
    %768 = vmatprep.subr.mxu0 0.0
    %769 = vmatpush1.msra.mxu0 %v123
    %770 = vmatprep.subr.mxu0 0.0
    %771 = vmatpush1.msra.mxu0 %v124
    %772 = vmatprep.subr.mxu0 0.0
    %773 = vmatpush1.msra.mxu0 %v125
    %774 = vmatprep.subr.mxu0 0.0
    %775 = vmatpush1.msra.mxu0 %v126
    %776 = vmatprep.subr.mxu0 0.0
    %777 = vmatpush1.msra.mxu0 %v127
    %778 = vmatprep.subr.mxu0 0.0
    %779 = vmatpush1.msra.mxu0 %v128
    %780 = vmatprep.subr.mxu0 0.0
    %781 = vmatpush1.msra.mxu0 0.0
    %782 = vmatprep.subr.mxu0 0.0
    %783 = vmatpush1.msra.mxu0 0.0
    %784 = vmatprep.subr.mxu0 0.0
    %785 = vmatpush1.msra.mxu0 0.0
    %786 = vmatprep.subr.mxu0 0.0
    %787 = vmatpush1.msra.mxu0 0.0
    %788 = vmatprep.subr.mxu0 0.0
    %789 = vmatpush1.msra.mxu0 0.0
    %790 = vmatprep.subr.mxu0 0.0
    %791 = vmatpush1.msra.mxu0 0.0
    %792 = vmatprep.subr.mxu0 0.0
    %793 = vmatpush1.msra.mxu0 0.0
    %794 = vmatprep.subr.mxu0 0.0
    %795 = vmatpush1.msra.mxu0 0.0
    %796 = vmatprep.subr.mxu0 0.0
    %797 = vmatpush1.msra.mxu0 0.0
    %798 = vmatprep.subr.mxu0 0.0
    %799 = vmatpush1.msra.mxu0 0.0
    %800 = vmatprep.subr.mxu0 0.0
    %801 = vmatpush1.msra.mxu0 0.0
    %802 = vmatprep.subr.mxu0 0.0
    %803 = vmatpush1.msra.mxu0 0.0
    %804 = vmatprep.subr.mxu0 0.0
    %805 = vmatpush1.msra.mxu0 0.0
    %806 = vmatprep.subr.mxu0 0.0
    %807 = vmatpush1.msra.mxu0 0.0
    %808 = vmatprep.subr.mxu0 0.0
    %809 = vmatpush1.msra.mxu0 0.0
    %810 = vmatprep.subr.mxu0 0.0
    %811 = vmatpush1.msra.mxu0 0.0
    %812 = vmatprep.mubr.f32.mxu0 0.0
    %813 = vmatmul.mubr.f32.gmra.mrb[0].mxu0 %v677
    %v814 = vpop.f32.mrb[0].mxu0
    %v815 = vadd.f32 0.0, %v814
    %v816 = vpop.f32.mrb[0].mxu0
    %817 = vdwg.mxu0
    %v818 = vmul.f32 %v745, %v745
    %v819 = vsub.f32 %v815, %v818
    %v820 = vadd.f32 %v819, 1e-05
    %v821 = vrsqrt.pop %v820
    %v822 = vmul.f32 %v129, %v821
    %v823 = vmul.f32 %v745, %v822
    %v825 = vrot.slane %v823, 7
    %v827 = vsub.f32 %v129, %v825
    %v828 = vlaneseq
    %v829 = vshrl.u32 %v828, 7
    %v830 = vsub.s32 0, %v829
    %v831 = vrot.slane %v822, %v830
    %v832 = vmul.f32 %v652, %v831
    %v833 = vmul.f32 %v653, %v831
    %v834 = vmul.f32 %v654, %v831
    %v835 = vmul.f32 %v655, %v831
    %v836 = vlaneseq
    %v837 = vshrl.u32 %v836, 7
    %v838 = vsub.s32 1, %v837
    %v839 = vrot.slane %v827, %v838
    %v840 = vadd.f32 %v832, %v839
    %v841 = vadd.f32 %v833, %v839
    %v842 = vadd.f32 %v834, %v839
    %v843 = vadd.f32 %v835, %v839
    %v844 = vmax.f32 %v840, 0.0
    %v845 = vmax.f32 %v841, 0.0
    %v846 = vmax.f32 %v842, 0.0
    %v847 = vmax.f32 %v843, 0.0
    %848 = vmatprep.subr.mxu0 0.0
    %849 = vmatpush1.msra.mxu0 %v844
    %850 = vmatprep.subr.mxu0 0.0
    %851 = vmatpush1.msra.mxu0 %v845
    %852 = vmatprep.subr.mxu0 0.0
    %853 = vmatpush1.msra.mxu0 %v846
    %854 = vmatprep.subr.mxu0 0.0
    %855 = vmatpush1.msra.mxu0 %v847
    %856 = vmatprep.subr.mxu0 0.0
    %857 = vmatpush1.msra.mxu0 0.0
    %858 = vmatprep.subr.mxu0 0.0
    %859 = vmatpush1.msra.mxu0 0.0
    %860 = vmatprep.subr.mxu0 0.0
    %861 = vmatpush1.msra.mxu0 0.0
    %862 = vmatprep.subr.mxu0 0.0
    %863 = vmatpush1.msra.mxu0 0.0
    %864 = vmatprep.subr.mxu0 0.0
    %865 = vmatpush1.msra.mxu0 0.0
    %866 = vmatprep.subr.mxu0 0.0
    %867 = vmatpush1.msra.mxu0 0.0
    %868 = vmatprep.subr.mxu0 0.0
    %869 = vmatpush1.msra.mxu0 0.0
    %870 = vmatprep.subr.mxu0 0.0
    %871 = vmatpush1.msra.mxu0 0.0
    %872 = vmatprep.subr.mxu0 0.0
    %873 = vmatpush1.msra.mxu0 0.0
    %874 = vmatprep.subr.mxu0 0.0
    %875 = vmatpush1.msra.mxu0 0.0
    %876 = vmatprep.subr.mxu0 0.0
    %877 = vmatpush1.msra.mxu0 0.0
    %878 = vmatprep.subr.mxu0 0.0
    %879 = vmatpush1.msra.mxu0 0.0
    %880 = vmatprep.subr.mxu0 0.0
    %881 = vmatpush1.msra.mxu0 0.0
    %882 = vmatprep.subr.mxu0 0.0
    %883 = vmatpush1.msra.mxu0 0.0
    %884 = vmatprep.subr.mxu0 0.0
    %885 = vmatpush1.msra.mxu0 0.0
    %886 = vmatprep.subr.mxu0 0.0
    %887 = vmatpush1.msra.mxu0 0.0
    %888 = vmatprep.subr.mxu0 0.0
    %889 = vmatpush1.msra.mxu0 0.0
    %890 = vmatprep.subr.mxu0 0.0
    %891 = vmatpush1.msra.mxu0 0.0
    %892 = vmatprep.subr.mxu0 0.0
    %893 = vmatpush1.msra.mxu0 0.0
    %894 = vmatprep.subr.mxu0 0.0
    %895 = vmatpush1.msra.mxu0 0.0
    %896 = vmatprep.subr.mxu0 0.0
    %897 = vmatpush1.msra.mxu0 0.0
    %898 = vmatprep.subr.mxu0 0.0
    %899 = vmatpush1.msra.mxu0 0.0
    %900 = vmatprep.subr.mxu0 0.0
    %901 = vmatpush1.msra.mxu0 0.0
    %902 = vmatprep.subr.mxu0 0.0
    %903 = vmatpush1.msra.mxu0 0.0
    %904 = vmatprep.subr.mxu0 0.0
    %905 = vmatpush1.msra.mxu0 0.0
    %906 = vmatprep.subr.mxu0 0.0
    %907 = vmatpush1.msra.mxu0 0.0
    %908 = vmatprep.subr.mxu0 0.0
    %909 = vmatpush1.msra.mxu0 0.0
    %910 = vmatprep.subr.mxu0 0.0
    %911 = vmatpush1.msra.mxu0 0.0
    %912 = vmatprep.mubr.f32.mxu0 0.0
    %913 = vmatmul.mubr.f32.gmra.mrb[0].mxu0 %v141
    %v914 = vpop.f32.mrb[0].mxu0
    %v915 = vadd.f32 0.0, %v914
    %v916 = vpop.f32.mrb[0].mxu0
    %917 = vmatprep.mubr.f32.mxu0 0.0
    %918 = vmatmul.mubr.f32.gmra.mrb[0].mxu0 %v144
    %v919 = vpop.f32.mrb[0].mxu0
    %v920 = vadd.f32 0.0, %v919
    %v921 = vpop.f32.mrb[0].mxu0
    %922 = vmatprep.mubr.f32.mxu0 0.0
    %923 = vmatmul.mubr.f32.gmra.mrb[0].mxu0 %v147
    %v924 = vpop.f32.mrb[0].mxu0
    %v925 = vadd.f32 0.0, %v924
    %v926 = vpop.f32.mrb[0].mxu0
    %927 = vmatprep.mubr.f32.mxu0 0.0
    %928 = vmatmul.mubr.f32.gmra.mrb[0].mxu0 %v150
    %v929 = vpop.f32.mrb[0].mxu0
    %v930 = vadd.f32 0.0, %v929
    %v931 = vpop.f32.mrb[0].mxu0
    %932 = vdwg.mxu0
    %933 = vmatprep.subr.mxu0 0.0
    %934 = vmatpush1.msra.mxu0 %v844
    %935 = vmatprep.subr.mxu0 0.0
    %936 = vmatpush1.msra.mxu0 %v845
    %937 = vmatprep.subr.mxu0 0.0
    %938 = vmatpush1.msra.mxu0 %v846
    %939 = vmatprep.subr.mxu0 0.0
    %940 = vmatpush1.msra.mxu0 %v847
    %941 = vmatprep.subr.mxu0 0.0
    %942 = vmatpush1.msra.mxu0 0.0
    %943 = vmatprep.subr.mxu0 0.0
    %944 = vmatpush1.msra.mxu0 0.0
    %945 = vmatprep.subr.mxu0 0.0
    %946 = vmatpush1.msra.mxu0 0.0
    %947 = vmatprep.subr.mxu0 0.0
    %948 = vmatpush1.msra.mxu0 0.0
    %949 = vmatprep.subr.mxu0 0.0
    %950 = vmatpush1.msra.mxu0 0.0
    %951 = vmatprep.subr.mxu0 0.0
    %952 = vmatpush1.msra.mxu0 0.0
    %953 = vmatprep.subr.mxu0 0.0
    %954 = vmatpush1.msra.mxu0 0.0
    %955 = vmatprep.subr.mxu0 0.0
    %956 = vmatpush1.msra.mxu0 0.0
    %957 = vmatprep.subr.mxu0 0.0
    %958 = vmatpush1.msra.mxu0 0.0
    %959 = vmatprep.subr.mxu0 0.0
    %960 = vmatpush1.msra.mxu0 0.0
    %961 = vmatprep.subr.mxu0 0.0
    %962 = vmatpush1.msra.mxu0 0.0
    %963 = vmatprep.subr.mxu0 0.0
    %964 = vmatpush1.msra.mxu0 0.0
    %965 = vmatprep.subr.mxu0 0.0
    %966 = vmatpush1.msra.mxu0 0.0
    %967 = vmatprep.subr.mxu0 0.0
    %968 = vmatpush1.msra.mxu0 0.0
    %969 = vmatprep.subr.mxu0 0.0
    %970 = vmatpush1.msra.mxu0 0.0
    %971 = vmatprep.subr.mxu0 0.0
    %972 = vmatpush1.msra.mxu0 0.0
    %973 = vmatprep.subr.mxu0 0.0
    %974 = vmatpush1.msra.mxu0 0.0
    %975 = vmatprep.subr.mxu0 0.0
    %976 = vmatpush1.msra.mxu0 0.0
    %977 = vmatprep.subr.mxu0 0.0
    %978 = vmatpush1.msra.mxu0 0.0
    %979 = vmatprep.subr.mxu0 0.0
    %980 = vmatpush1.msra.mxu0 0.0
    %981 = vmatprep.subr.mxu0 0.0
    %982 = vmatpush1.msra.mxu0 0.0
    %983 = vmatprep.subr.mxu0 0.0
    %984 = vmatpush1.msra.mxu0 0.0
    %985 = vmatprep.subr.mxu0 0.0
    %986 = vmatpush1.msra.mxu0 0.0
    %987 = vmatprep.subr.mxu0 0.0
    %988 = vmatpush1.msra.mxu0 0.0
    %989 = vmatprep.subr.mxu0 0.0
    %990 = vmatpush1.msra.mxu0 0.0
    %991 = vmatprep.subr.mxu0 0.0
    %992 = vmatpush1.msra.mxu0 0.0
    %993 = vmatprep.subr.mxu0 0.0
    %994 = vmatpush1.msra.mxu0 0.0
    %995 = vmatprep.subr.mxu0 0.0
    %996 = vmatpush1.msra.mxu0 0.0
    %997 = vmatprep.mubr.f32.mxu0 0.0
    %998 = vmatmul.mubr.f32.gmra.mrb[0].mxu0 %v238
    %v999 = vpop.f32.mrb[0].mxu0
    %v1000 = vadd.f32 0.0, %v999
    %v1001 = vpop.f32.mrb[0].mxu0
    %1002 = vmatprep.mubr.f32.mxu0 0.0
    %1003 = vmatmul.mubr.f32.gmra.mrb[0].mxu0 %v241
    %v1004 = vpop.f32.mrb[0].mxu0
    %v1005 = vadd.f32 0.0, %v1004
    %v1006 = vpop.f32.mrb[0].mxu0
    %1007 = vmatprep.mubr.f32.mxu0 0.0
    %1008 = vmatmul.mubr.f32.gmra.mrb[0].mxu0 %v244
    %v1009 = vpop.f32.mrb[0].mxu0
    %v1010 = vadd.f32 0.0, %v1009
    %v1011 = vpop.f32.mrb[0].mxu0
    %1012 = vmatprep.mubr.f32.mxu0 0.0
    %1013 = vmatmul.mubr.f32.gmra.mrb[0].mxu0 %v247
    %v1014 = vpop.f32.mrb[0].mxu0
    %v1015 = vadd.f32 0.0, %v1014
    %v1016 = vpop.f32.mrb[0].mxu0
    %1017 = vdwg.mxu0
    %v1018 = vld [vmem:[#allocation7] sm:$0xff]
    %v1019 = vld [vmem:[#allocation7 + $0x8] sm:$0xff]
    %v1020 = vld [vmem:[#allocation7 + $0x10] sm:$0xff]
    %v1021 = vld [vmem:[#allocation7 + $0x18] sm:$0xff]
    %v1022 = vld [vmem:[#allocation7 + $0x20] sm:$0xff]
    %v1023 = vld [vmem:[#allocation7 + $0x28] sm:$0xff]
    %v1024 = vld [vmem:[#allocation7 + $0x30] sm:$0xff]
    %v1025 = vld [vmem:[#allocation7 + $0x38] sm:$0xff]
    %v1026 = vld [vmem:[#allocation7 + $0x40] sm:$0xff]
    %v1027 = vld [vmem:[#allocation7 + $0x48] sm:$0xff]
    %v1028 = vld [vmem:[#allocation7 + $0x50] sm:$0xff]
    %v1029 = vld [vmem:[#allocation7 + $0x58] sm:$0xff]
    %v1030 = vld [vmem:[#allocation7 + $0x60] sm:$0xff]
    %v1031 = vld [vmem:[#allocation7 + $0x68] sm:$0xff]
    %v1032 = vld [vmem:[#allocation7 + $0x70] sm:$0xff]
    %v1033 = vld [vmem:[#allocation7 + $0x78] sm:$0xff]
    %s1034 = scalar_lea.vmem [#allocation7], 128
    %v1035 = vld [vmem:[%s1034] sm:$0xff]
    %v1036 = vld [vmem:[%s1034 + $0x8] sm:$0xff]
    %v1037 = vld [vmem:[%s1034 + $0x10] sm:$0xff]
    %v1038 = vld [vmem:[%s1034 + $0x18] sm:$0xff]
    %v1039 = vld [vmem:[%s1034 + $0x20] sm:$0xff]
    %v1040 = vld [vmem:[%s1034 + $0x28] sm:$0xff]
    %v1041 = vld [vmem:[%s1034 + $0x30] sm:$0xff]
    %v1042 = vld [vmem:[%s1034 + $0x38] sm:$0xff]
    %v1043 = vld [vmem:[%s1034 + $0x40] sm:$0xff]
    %v1044 = vld [vmem:[%s1034 + $0x48] sm:$0xff]
    %v1045 = vld [vmem:[%s1034 + $0x50] sm:$0xff]
    %v1046 = vld [vmem:[%s1034 + $0x58] sm:$0xff]
    %v1047 = vld [vmem:[%s1034 + $0x60] sm:$0xff]
    %v1048 = vld [vmem:[%s1034 + $0x68] sm:$0xff]
    %v1049 = vld [vmem:[%s1034 + $0x70] sm:$0xff]
    %v1050 = vld [vmem:[%s1034 + $0x78] sm:$0xff]
    %1051 = vmatprep.subr.mxu0 0.0
    %1052 = vmatpush1.msra.mxu0 %v1035
    %1053 = vmatprep.subr.mxu0 0.0
    %1054 = vmatpush1.msra.mxu0 %v1036
    %1055 = vmatprep.subr.mxu0 0.0
    %1056 = vmatpush1.msra.mxu0 %v1037
    %1057 = vmatprep.subr.mxu0 0.0
    %1058 = vmatpush1.msra.mxu0 %v1038
    %1059 = vmatprep.subr.mxu0 0.0
    %1060 = vmatpush1.msra.mxu0 %v1039
    %1061 = vmatprep.subr.mxu0 0.0
    %1062 = vmatpush1.msra.mxu0 %v1040
    %1063 = vmatprep.subr.mxu0 0.0
    %1064 = vmatpush1.msra.mxu0 %v1041
    %1065 = vmatprep.subr.mxu0 0.0
    %1066 = vmatpush1.msra.mxu0 %v1042
    %1067 = vmatprep.subr.mxu0 0.0
    %1068 = vmatpush1.msra.mxu0 %v1043
    %1069 = vmatprep.subr.mxu0 0.0
    %1070 = vmatpush1.msra.mxu0 %v1044
    %1071 = vmatprep.subr.mxu0 0.0
    %1072 = vmatpush1.msra.mxu0 %v1045
    %1073 = vmatprep.subr.mxu0 0.0
    %1074 = vmatpush1.msra.mxu0 %v1046
    %1075 = vmatprep.subr.mxu0 0.0
    %1076 = vmatpush1.msra.mxu0 %v1047
    %1077 = vmatprep.subr.mxu0 0.0
    %1078 = vmatpush1.msra.mxu0 %v1048
    %1079 = vmatprep.subr.mxu0 0.0
    %1080 = vmatpush1.msra.mxu0 %v1049
    %1081 = vmatprep.subr.mxu0 0.0
    %1082 = vmatpush1.msra.mxu0 %v1050
    %1083 = vmatprep.subr.mxu0 0.0
    %1084 = vmatpush1.msra.mxu0 0.0
    %1085 = vmatprep.subr.mxu0 0.0
    %1086 = vmatpush1.msra.mxu0 0.0
    %1087 = vmatprep.subr.mxu0 0.0
    %1088 = vmatpush1.msra.mxu0 0.0
    %1089 = vmatprep.subr.mxu0 0.0
    %1090 = vmatpush1.msra.mxu0 0.0
    %1091 = vmatprep.subr.mxu0 0.0
    %1092 = vmatpush1.msra.mxu0 0.0
    %1093 = vmatprep.subr.mxu0 0.0
    %1094 = vmatpush1.msra.mxu0 0.0
    %1095 = vmatprep.subr.mxu0 0.0
    %1096 = vmatpush1.msra.mxu0 0.0
    %1097 = vmatprep.subr.mxu0 0.0
    %1098 = vmatpush1.msra.mxu0 0.0
    %1099 = vmatprep.subr.mxu0 0.0
    %1100 = vmatpush1.msra.mxu0 0.0
    %1101 = vmatprep.subr.mxu0 0.0
    %1102 = vmatpush1.msra.mxu0 0.0
    %1103 = vmatprep.subr.mxu0 0.0
    %1104 = vmatpush1.msra.mxu0 0.0
    %1105 = vmatprep.subr.mxu0 0.0
    %1106 = vmatpush1.msra.mxu0 0.0
    %1107 = vmatprep.subr.mxu0 0.0
    %1108 = vmatpush1.msra.mxu0 0.0
    %1109 = vmatprep.subr.mxu0 0.0
    %1110 = vmatpush1.msra.mxu0 0.0
    %1111 = vmatprep.subr.mxu0 0.0
    %1112 = vmatpush1.msra.mxu0 0.0
    %1113 = vmatprep.subr.mxu0 0.0
    %1114 = vmatpush1.msra.mxu0 0.0
    %1115 = vmatprep.mubr.f32.mxu0 0.0
    %1116 = vmatmul.mubr.f32.gmra.mrb[0].mxu0 %v844
    %v1117 = vpop.f32.mrb[0].mxu0
    %v1118 = vadd.f32 0.0, %v1117
    %v1119 = vpop.f32.mrb[0].mxu0
    %1120 = vmatprep.mubr.f32.mxu0 0.0
    %1121 = vmatmul.mubr.f32.gmra.mrb[0].mxu0 %v845
    %v1122 = vpop.f32.mrb[0].mxu0
    %v1123 = vadd.f32 0.0, %v1122
    %v1124 = vpop.f32.mrb[0].mxu0
    %1125 = vmatprep.mubr.f32.mxu0 0.0
    %1126 = vmatmul.mubr.f32.gmra.mrb[0].mxu0 %v846
    %v1127 = vpop.f32.mrb[0].mxu0
    %v1128 = vadd.f32 0.0, %v1127
    %v1129 = vpop.f32.mrb[0].mxu0
    %1130 = vmatprep.mubr.f32.mxu0 0.0
    %1131 = vmatmul.mubr.f32.gmra.mrb[0].mxu0 %v847
    %v1132 = vpop.f32.mrb[0].mxu0
    %v1133 = vadd.f32 0.0, %v1132
    %v1134 = vpop.f32.mrb[0].mxu0
    %1135 = vdwg.mxu0
    %1136 = vmatprep.subr.mxu0 0.0
    %1137 = vmatpush1.msra.mxu0 %v1018
    %1138 = vmatprep.subr.mxu0 0.0
    %1139 = vmatpush1.msra.mxu0 %v1019
    %1140 = vmatprep.subr.mxu0 0.0
    %1141 = vmatpush1.msra.mxu0 %v1020
    %1142 = vmatprep.subr.mxu0 0.0
    %1143 = vmatpush1.msra.mxu0 %v1021
    %1144 = vmatprep.subr.mxu0 0.0
    %1145 = vmatpush1.msra.mxu0 %v1022
    %1146 = vmatprep.subr.mxu0 0.0
    %1147 = vmatpush1.msra.mxu0 %v1023
    %1148 = vmatprep.subr.mxu0 0.0
    %1149 = vmatpush1.msra.mxu0 %v1024
    %1150 = vmatprep.subr.mxu0 0.0
    %1151 = vmatpush1.msra.mxu0 %v1025
    %1152 = vmatprep.subr.mxu0 0.0
    %1153 = vmatpush1.msra.mxu0 %v1026
    %1154 = vmatprep.subr.mxu0 0.0
    %1155 = vmatpush1.msra.mxu0 %v1027
    %1156 = vmatprep.subr.mxu0 0.0
    %1157 = vmatpush1.msra.mxu0 %v1028
    %1158 = vmatprep.subr.mxu0 0.0
    %1159 = vmatpush1.msra.mxu0 %v1029
    %1160 = vmatprep.subr.mxu0 0.0
    %1161 = vmatpush1.msra.mxu0 %v1030
    %1162 = vmatprep.subr.mxu0 0.0
    %1163 = vmatpush1.msra.mxu0 %v1031
    %1164 = vmatprep.subr.mxu0 0.0
    %1165 = vmatpush1.msra.mxu0 %v1032
    %1166 = vmatprep.subr.mxu0 0.0
    %1167 = vmatpush1.msra.mxu0 %v1033
    %1168 = vmatprep.subr.mxu0 0.0
    %1169 = vmatpush1.msra.mxu0 0.0
    %1170 = vmatprep.subr.mxu0 0.0
    %1171 = vmatpush1.msra.mxu0 0.0
    %1172 = vmatprep.subr.mxu0 0.0
    %1173 = vmatpush1.msra.mxu0 0.0
    %1174 = vmatprep.subr.mxu0 0.0
    %1175 = vmatpush1.msra.mxu0 0.0
    %1176 = vmatprep.subr.mxu0 0.0
    %1177 = vmatpush1.msra.mxu0 0.0
    %1178 = vmatprep.subr.mxu0 0.0
    %1179 = vmatpush1.msra.mxu0 0.0
    %1180 = vmatprep.subr.mxu0 0.0
    %1181 = vmatpush1.msra.mxu0 0.0
    %1182 = vmatprep.subr.mxu0 0.0
    %1183 = vmatpush1.msra.mxu0 0.0
    %1184 = vmatprep.subr.mxu0 0.0
    %1185 = vmatpush1.msra.mxu0 0.0
    %1186 = vmatprep.subr.mxu0 0.0
    %1187 = vmatpush1.msra.mxu0 0.0
    %1188 = vmatprep.subr.mxu0 0.0
    %1189 = vmatpush1.msra.mxu0 0.0
    %1190 = vmatprep.subr.mxu0 0.0
    %1191 = vmatpush1.msra.mxu0 0.0
    %1192 = vmatprep.subr.mxu0 0.0
    %1193 = vmatpush1.msra.mxu0 0.0
    %1194 = vmatprep.subr.mxu0 0.0
    %1195 = vmatpush1.msra.mxu0 0.0
    %1196 = vmatprep.subr.mxu0 0.0
    %1197 = vmatpush1.msra.mxu0 0.0
    %1198 = vmatprep.subr.mxu0 0.0
    %1199 = vmatpush1.msra.mxu0 0.0
    %1200 = vmatprep.mubr.f32.mxu0 0.0
    %1201 = vmatmul.mubr.f32.gmra.mrb[0].mxu0 %v915
    %v1202 = vpop.f32.mrb[0].mxu0
    %v1203 = vadd.f32 %v1118, %v1202
    %v1204 = vpop.f32.mrb[0].mxu0
    %1205 = vmatprep.mubr.f32.mxu0 0.0
    %1206 = vmatmul.mubr.f32.gmra.mrb[0].mxu0 %v920
    %v1207 = vpop.f32.mrb[0].mxu0
    %v1208 = vadd.f32 %v1123, %v1207
    %v1209 = vpop.f32.mrb[0].mxu0
    %1210 = vmatprep.mubr.f32.mxu0 0.0
    %1211 = vmatmul.mubr.f32.gmra.mrb[0].mxu0 %v925
    %v1212 = vpop.f32.mrb[0].mxu0
    %v1213 = vadd.f32 %v1128, %v1212
    %v1214 = vpop.f32.mrb[0].mxu0
    %1215 = vmatprep.mubr.f32.mxu0 0.0
    %1216 = vmatmul.mubr.f32.gmra.mrb[0].mxu0 %v930
    %v1217 = vpop.f32.mrb[0].mxu0
    %v1218 = vadd.f32 %v1133, %v1217
    %v1219 = vpop.f32.mrb[0].mxu0
    %1220 = vdwg.mxu0
    %s1221 = scalar_lea.vmem [#allocation7], 256
    %v1222 = vld [vmem:[%s1221] sm:$0xff]
    %v1223 = vld [vmem:[%s1221 + $0x8] sm:$0xff]
    %v1224 = vld [vmem:[%s1221 + $0x10] sm:$0xff]
    %v1225 = vld [vmem:[%s1221 + $0x18] sm:$0xff]
    %v1226 = vld [vmem:[%s1221 + $0x20] sm:$0xff]
    %v1227 = vld [vmem:[%s1221 + $0x28] sm:$0xff]
    %v1228 = vld [vmem:[%s1221 + $0x30] sm:$0xff]
    %v1229 = vld [vmem:[%s1221 + $0x38] sm:$0xff]
    %v1230 = vld [vmem:[%s1221 + $0x40] sm:$0xff]
    %v1231 = vld [vmem:[%s1221 + $0x48] sm:$0xff]
    %v1232 = vld [vmem:[%s1221 + $0x50] sm:$0xff]
    %v1233 = vld [vmem:[%s1221 + $0x58] sm:$0xff]
    %v1234 = vld [vmem:[%s1221 + $0x60] sm:$0xff]
    %v1235 = vld [vmem:[%s1221 + $0x68] sm:$0xff]
    %v1236 = vld [vmem:[%s1221 + $0x70] sm:$0xff]
    %v1237 = vld [vmem:[%s1221 + $0x78] sm:$0xff]
    %1238 = vmatprep.subr.mxu0 0.0
    %1239 = vmatpush1.msra.mxu0 %v1222
    %1240 = vmatprep.subr.mxu0 0.0
    %1241 = vmatpush1.msra.mxu0 %v1223
    %1242 = vmatprep.subr.mxu0 0.0
    %1243 = vmatpush1.msra.mxu0 %v1224
    %1244 = vmatprep.subr.mxu0 0.0
    %1245 = vmatpush1.msra.mxu0 %v1225
    %1246 = vmatprep.subr.mxu0 0.0
    %1247 = vmatpush1.msra.mxu0 %v1226
    %1248 = vmatprep.subr.mxu0 0.0
    %1249 = vmatpush1.msra.mxu0 %v1227
    %1250 = vmatprep.subr.mxu0 0.0
    %1251 = vmatpush1.msra.mxu0 %v1228
    %1252 = vmatprep.subr.mxu0 0.0
    %1253 = vmatpush1.msra.mxu0 %v1229
    %1254 = vmatprep.subr.mxu0 0.0
    %1255 = vmatpush1.msra.mxu0 %v1230
    %1256 = vmatprep.subr.mxu0 0.0
    %1257 = vmatpush1.msra.mxu0 %v1231
    %1258 = vmatprep.subr.mxu0 0.0
    %1259 = vmatpush1.msra.mxu0 %v1232
    %1260 = vmatprep.subr.mxu0 0.0
    %1261 = vmatpush1.msra.mxu0 %v1233
    %1262 = vmatprep.subr.mxu0 0.0
    %1263 = vmatpush1.msra.mxu0 %v1234
    %1264 = vmatprep.subr.mxu0 0.0
    %1265 = vmatpush1.msra.mxu0 %v1235
    %1266 = vmatprep.subr.mxu0 0.0
    %1267 = vmatpush1.msra.mxu0 %v1236
    %1268 = vmatprep.subr.mxu0 0.0
    %1269 = vmatpush1.msra.mxu0 %v1237
    %1270 = vmatprep.subr.mxu0 0.0
    %1271 = vmatpush1.msra.mxu0 0.0
    %1272 = vmatprep.subr.mxu0 0.0
    %1273 = vmatpush1.msra.mxu0 0.0
    %1274 = vmatprep.subr.mxu0 0.0
    %1275 = vmatpush1.msra.mxu0 0.0
    %1276 = vmatprep.subr.mxu0 0.0
    %1277 = vmatpush1.msra.mxu0 0.0
    %1278 = vmatprep.subr.mxu0 0.0
    %1279 = vmatpush1.msra.mxu0 0.0
    %1280 = vmatprep.subr.mxu0 0.0
    %1281 = vmatpush1.msra.mxu0 0.0
    %1282 = vmatprep.subr.mxu0 0.0
    %1283 = vmatpush1.msra.mxu0 0.0
    %1284 = vmatprep.subr.mxu0 0.0
    %1285 = vmatpush1.msra.mxu0 0.0
    %1286 = vmatprep.subr.mxu0 0.0
    %1287 = vmatpush1.msra.mxu0 0.0
    %1288 = vmatprep.subr.mxu0 0.0
    %1289 = vmatpush1.msra.mxu0 0.0
    %1290 = vmatprep.subr.mxu0 0.0
    %1291 = vmatpush1.msra.mxu0 0.0
    %1292 = vmatprep.subr.mxu0 0.0
    %1293 = vmatpush1.msra.mxu0 0.0
    %1294 = vmatprep.subr.mxu0 0.0
    %1295 = vmatpush1.msra.mxu0 0.0
    %1296 = vmatprep.subr.mxu0 0.0
    %1297 = vmatpush1.msra.mxu0 0.0
    %1298 = vmatprep.subr.mxu0 0.0
    %1299 = vmatpush1.msra.mxu0 0.0
    %1300 = vmatprep.subr.mxu0 0.0
    %1301 = vmatpush1.msra.mxu0 0.0
    %1302 = vmatprep.mubr.f32.mxu0 0.0
    %1303 = vmatmul.mubr.f32.gmra.mrb[0].mxu0 %v1000
    %v1304 = vpop.f32.mrb[0].mxu0
    %v1305 = vadd.f32 0.0, %v1304
    %v1306 = vpop.f32.mrb[0].mxu0
    %1307 = vmatprep.mubr.f32.mxu0 0.0
    %1308 = vmatmul.mubr.f32.gmra.mrb[0].mxu0 %v1005
    %v1309 = vpop.f32.mrb[0].mxu0
    %v1310 = vadd.f32 0.0, %v1309
    %v1311 = vpop.f32.mrb[0].mxu0
    %1312 = vmatprep.mubr.f32.mxu0 0.0
    %1313 = vmatmul.mubr.f32.gmra.mrb[0].mxu0 %v1010
    %v1314 = vpop.f32.mrb[0].mxu0
    %v1315 = vadd.f32 0.0, %v1314
    %v1316 = vpop.f32.mrb[0].mxu0
    %1317 = vmatprep.mubr.f32.mxu0 0.0
    %1318 = vmatmul.mubr.f32.gmra.mrb[0].mxu0 %v1015
    %v1319 = vpop.f32.mrb[0].mxu0
    %v1320 = vadd.f32 0.0, %v1319
    %v1321 = vpop.f32.mrb[0].mxu0
    %1322 = vdwg.mxu0
    %v1323 = vadd.f32 %v1203, %v1305
    %v1324 = vadd.f32 %v1208, %v1310
    %v1325 = vadd.f32 %v1213, %v1315
    %v1326 = vadd.f32 %v1218, %v1320
    %v1327 = vadd.f32 %v1323, %v1324
    %v1328 = vadd.f32 %v1327, %v1325
    %v1329 = vadd.f32 %v1328, %v1326
    %v1330 = vrot.slane %v1329, 4
    %v1331 = vadd.f32 %v1329, %v1330
    %v1332 = vrot.slane %v1331, 2
    %v1333 = vadd.f32 %v1331, %v1332
    %v1334 = vrot.slane %v1333, 1
    %v1335 = vadd.f32 %v1333, %v1334
    %v1336 = vmul.f32 %v1323, %v1323
    %v1337 = vmul.f32 %v1324, %v1324
    %v1338 = vmul.f32 %v1325, %v1325
    %v1339 = vmul.f32 %v1326, %v1326
    %v1340 = vadd.f32 %v1336, %v1337
    %v1341 = vadd.f32 %v1340, %v1338
    %v1342 = vadd.f32 %v1341, %v1339
    %v1343 = vrot.slane %v1342, 4
    %v1344 = vadd.f32 %v1342, %v1343
    %v1345 = vrot.slane %v1344, 2
    %v1346 = vadd.f32 %v1344, %v1345
    %v1347 = vrot.slane %v1346, 1
    %v1348 = vadd.f32 %v1346, %v1347
    %1349 = vmatprep.subr.mxu0 0.0
    %1350 = vmatpush1.msra.mxu0 %v113
    %1351 = vmatprep.subr.mxu0 0.0
    %1352 = vmatpush1.msra.mxu0 %v114
    %1353 = vmatprep.subr.mxu0 0.0
    %1354 = vmatpush1.msra.mxu0 %v115
    %1355 = vmatprep.subr.mxu0 0.0
    %1356 = vmatpush1.msra.mxu0 %v116
    %1357 = vmatprep.subr.mxu0 0.0
    %1358 = vmatpush1.msra.mxu0 %v117
    %1359 = vmatprep.subr.mxu0 0.0
    %1360 = vmatpush1.msra.mxu0 %v118
    %1361 = vmatprep.subr.mxu0 0.0
    %1362 = vmatpush1.msra.mxu0 %v119
    %1363 = vmatprep.subr.mxu0 0.0
    %1364 = vmatpush1.msra.mxu0 %v120
    %1365 = vmatprep.subr.mxu0 0.0
    %1366 = vmatpush1.msra.mxu0 %v121
    %1367 = vmatprep.subr.mxu0 0.0
    %1368 = vmatpush1.msra.mxu0 %v122
    %1369 = vmatprep.subr.mxu0 0.0
    %1370 = vmatpush1.msra.mxu0 %v123
    %1371 = vmatprep.subr.mxu0 0.0
    %1372 = vmatpush1.msra.mxu0 %v124
    %1373 = vmatprep.subr.mxu0 0.0
    %1374 = vmatpush1.msra.mxu0 %v125
    %1375 = vmatprep.subr.mxu0 0.0
    %1376 = vmatpush1.msra.mxu0 %v126
    %1377 = vmatprep.subr.mxu0 0.0
    %1378 = vmatpush1.msra.mxu0 %v127
    %1379 = vmatprep.subr.mxu0 0.0
    %1380 = vmatpush1.msra.mxu0 %v128
    %1381 = vmatprep.subr.mxu0 0.0
    %1382 = vmatpush1.msra.mxu0 0.0
    %1383 = vmatprep.subr.mxu0 0.0
    %1384 = vmatpush1.msra.mxu0 0.0
    %1385 = vmatprep.subr.mxu0 0.0
    %1386 = vmatpush1.msra.mxu0 0.0
    %1387 = vmatprep.subr.mxu0 0.0
    %1388 = vmatpush1.msra.mxu0 0.0
    %1389 = vmatprep.subr.mxu0 0.0
    %1390 = vmatpush1.msra.mxu0 0.0
    %1391 = vmatprep.subr.mxu0 0.0
    %1392 = vmatpush1.msra.mxu0 0.0
    %1393 = vmatprep.subr.mxu0 0.0
    %1394 = vmatpush1.msra.mxu0 0.0
    %1395 = vmatprep.subr.mxu0 0.0
    %1396 = vmatpush1.msra.mxu0 0.0
    %1397 = vmatprep.subr.mxu0 0.0
    %1398 = vmatpush1.msra.mxu0 0.0
    %1399 = vmatprep.subr.mxu0 0.0
    %1400 = vmatpush1.msra.mxu0 0.0
    %1401 = vmatprep.subr.mxu0 0.0
    %1402 = vmatpush1.msra.mxu0 0.0
    %1403 = vmatprep.subr.mxu0 0.0
    %1404 = vmatpush1.msra.mxu0 0.0
    %1405 = vmatprep.subr.mxu0 0.0
    %1406 = vmatpush1.msra.mxu0 0.0
    %1407 = vmatprep.subr.mxu0 0.0
    %1408 = vmatpush1.msra.mxu0 0.0
    %1409 = vmatprep.subr.mxu0 0.0
    %1410 = vmatpush1.msra.mxu0 0.0
    %1411 = vmatprep.subr.mxu0 0.0
    %1412 = vmatpush1.msra.mxu0 0.0
    %1413 = vmatprep.mubr.f32.mxu0 0.0
    %1414 = vmatmul.mubr.f32.gmra.mrb[0].mxu0 %v1335
    %v1415 = vpop.f32.mrb[0].mxu0
    %v1416 = vadd.f32 0.0, %v1415
    %v1417 = vpop.f32.mrb[0].mxu0
    %1418 = vdwg.mxu0
    %1419 = vmatprep.subr.mxu0 0.0
    %1420 = vmatpush1.msra.mxu0 %v113
    %1421 = vmatprep.subr.mxu0 0.0
    %1422 = vmatpush1.msra.mxu0 %v114
    %1423 = vmatprep.subr.mxu0 0.0
    %1424 = vmatpush1.msra.mxu0 %v115
    %1425 = vmatprep.subr.mxu0 0.0
    %1426 = vmatpush1.msra.mxu0 %v116
    %1427 = vmatprep.subr.mxu0 0.0
    %1428 = vmatpush1.msra.mxu0 %v117
    %1429 = vmatprep.subr.mxu0 0.0
    %1430 = vmatpush1.msra.mxu0 %v118
    %1431 = vmatprep.subr.mxu0 0.0
    %1432 = vmatpush1.msra.mxu0 %v119
    %1433 = vmatprep.subr.mxu0 0.0
    %1434 = vmatpush1.msra.mxu0 %v120
    %1435 = vmatprep.subr.mxu0 0.0
    %1436 = vmatpush1.msra.mxu0 %v121
    %1437 = vmatprep.subr.mxu0 0.0
    %1438 = vmatpush1.msra.mxu0 %v122
    %1439 = vmatprep.subr.mxu0 0.0
    %1440 = vmatpush1.msra.mxu0 %v123
    %1441 = vmatprep.subr.mxu0 0.0
    %1442 = vmatpush1.msra.mxu0 %v124
    %1443 = vmatprep.subr.mxu0 0.0
    %1444 = vmatpush1.msra.mxu0 %v125
    %1445 = vmatprep.subr.mxu0 0.0
    %1446 = vmatpush1.msra.mxu0 %v126
    %1447 = vmatprep.subr.mxu0 0.0
    %1448 = vmatpush1.msra.mxu0 %v127
    %1449 = vmatprep.subr.mxu0 0.0
    %1450 = vmatpush1.msra.mxu0 %v128
    %1451 = vmatprep.subr.mxu0 0.0
    %1452 = vmatpush1.msra.mxu0 0.0
    %1453 = vmatprep.subr.mxu0 0.0
    %1454 = vmatpush1.msra.mxu0 0.0
    %1455 = vmatprep.subr.mxu0 0.0
    %1456 = vmatpush1.msra.mxu0 0.0
    %1457 = vmatprep.subr.mxu0 0.0
    %1458 = vmatpush1.msra.mxu0 0.0
    %1459 = vmatprep.subr.mxu0 0.0
    %1460 = vmatpush1.msra.mxu0 0.0
    %1461 = vmatprep.subr.mxu0 0.0
    %1462 = vmatpush1.msra.mxu0 0.0
    %1463 = vmatprep.subr.mxu0 0.0
    %1464 = vmatpush1.msra.mxu0 0.0
    %1465 = vmatprep.subr.mxu0 0.0
    %1466 = vmatpush1.msra.mxu0 0.0
    %1467 = vmatprep.subr.mxu0 0.0
    %1468 = vmatpush1.msra.mxu0 0.0
    %1469 = vmatprep.subr.mxu0 0.0
    %1470 = vmatpush1.msra.mxu0 0.0
    %1471 = vmatprep.subr.mxu0 0.0
    %1472 = vmatpush1.msra.mxu0 0.0
    %1473 = vmatprep.subr.mxu0 0.0
    %1474 = vmatpush1.msra.mxu0 0.0
    %1475 = vmatprep.subr.mxu0 0.0
    %1476 = vmatpush1.msra.mxu0 0.0
    %1477 = vmatprep.subr.mxu0 0.0
    %1478 = vmatpush1.msra.mxu0 0.0
    %1479 = vmatprep.subr.mxu0 0.0
    %1480 = vmatpush1.msra.mxu0 0.0
    %1481 = vmatprep.subr.mxu0 0.0
    %1482 = vmatpush1.msra.mxu0 0.0
    %1483 = vmatprep.mubr.f32.mxu0 0.0
    %1484 = vmatmul.mubr.f32.gmra.mrb[0].mxu0 %v1348
    %v1485 = vpop.f32.mrb[0].mxu0
    %v1486 = vadd.f32 0.0, %v1485
    %v1487 = vpop.f32.mrb[0].mxu0
    %1488 = vdwg.mxu0
    %v1489 = vmul.f32 %v1416, %v1416
    %v1490 = vsub.f32 %v1486, %v1489
    %v1491 = vadd.f32 %v1490, 1e-05
    %v1492 = vrsqrt.pop %v1491
    %v1494 = vrot.slane %v1492, 6
    %v1496 = vmul.f32 %v129, %v1494
    %v1498 = vrot.slane %v1496, 2
    %v1500 = vmul.f32 %v1416, %v1498
    %v1502 = vrot.slane %v1500, 5
    %v1504 = vsub.f32 %v129, %v1502
    %v1505 = vld [vmem:[#allocation8] sm:$0xff]
    %v1506 = vld [vmem:[#allocation8 + $0x8] sm:$0xff]
    %v1507 = vld [vmem:[#allocation8 + $0x10] sm:$0xff]
    %v1508 = vld [vmem:[#allocation8 + $0x18] sm:$0xff]
    %v1509 = vld [vmem:[#allocation8 + $0x20] sm:$0xff]
    %v1510 = vld [vmem:[#allocation8 + $0x28] sm:$0xff]
    %v1511 = vld [vmem:[#allocation8 + $0x30] sm:$0xff]
    %v1512 = vld [vmem:[#allocation8 + $0x38] sm:$0xff]
    %1513 = vmatprep.subr.mxu0 0.0
    %1514 = vmatpush1.msra.mxu0 %v1505
    %1515 = vmatprep.subr.mxu0 0.0
    %1516 = vmatpush1.msra.mxu0 %v1506
    %1517 = vmatprep.subr.mxu0 0.0
    %1518 = vmatpush1.msra.mxu0 %v1507
    %1519 = vmatprep.subr.mxu0 0.0
    %1520 = vmatpush1.msra.mxu0 %v1508
    %1521 = vmatprep.subr.mxu0 0.0
    %1522 = vmatpush1.msra.mxu0 %v1509
    %1523 = vmatprep.subr.mxu0 0.0
    %1524 = vmatpush1.msra.mxu0 %v1510
    %1525 = vmatprep.subr.mxu0 0.0
    %1526 = vmatpush1.msra.mxu0 %v1511
    %1527 = vmatprep.subr.mxu0 0.0
    %1528 = vmatpush1.msra.mxu0 %v1512
    %1529 = vmatprep.subr.mxu0 0.0
    %1530 = vmatpush1.msra.mxu0 0.0
    %1531 = vmatprep.subr.mxu0 0.0
    %1532 = vmatpush1.msra.mxu0 0.0
    %1533 = vmatprep.subr.mxu0 0.0
    %1534 = vmatpush1.msra.mxu0 0.0
    %1535 = vmatprep.subr.mxu0 0.0
    %1536 = vmatpush1.msra.mxu0 0.0
    %1537 = vmatprep.subr.mxu0 0.0
    %1538 = vmatpush1.msra.mxu0 0.0
    %1539 = vmatprep.subr.mxu0 0.0
    %1540 = vmatpush1.msra.mxu0 0.0
    %1541 = vmatprep.subr.mxu0 0.0
    %1542 = vmatpush1.msra.mxu0 0.0
    %1543 = vmatprep.subr.mxu0 0.0
    %1544 = vmatpush1.msra.mxu0 0.0
    %1545 = vmatprep.subr.mxu0 0.0
    %1546 = vmatpush1.msra.mxu0 0.0
    %1547 = vmatprep.subr.mxu0 0.0
    %1548 = vmatpush1.msra.mxu0 0.0
    %1549 = vmatprep.subr.mxu0 0.0
    %1550 = vmatpush1.msra.mxu0 0.0
    %1551 = vmatprep.subr.mxu0 0.0
    %1552 = vmatpush1.msra.mxu0 0.0
    %1553 = vmatprep.subr.mxu0 0.0
    %1554 = vmatpush1.msra.mxu0 0.0
    %1555 = vmatprep.subr.mxu0 0.0
    %1556 = vmatpush1.msra.mxu0 0.0
    %1557 = vmatprep.subr.mxu0 0.0
    %1558 = vmatpush1.msra.mxu0 0.0
    %1559 = vmatprep.subr.mxu0 0.0
    %1560 = vmatpush1.msra.mxu0 0.0
    %1561 = vmatprep.subr.mxu0 0.0
    %1562 = vmatpush1.msra.mxu0 0.0
    %1563 = vmatprep.subr.mxu0 0.0
    %1564 = vmatpush1.msra.mxu0 0.0
    %1565 = vmatprep.subr.mxu0 0.0
    %1566 = vmatpush1.msra.mxu0 0.0
    %1567 = vmatprep.subr.mxu0 0.0
    %1568 = vmatpush1.msra.mxu0 0.0
    %1569 = vmatprep.subr.mxu0 0.0
    %1570 = vmatpush1.msra.mxu0 0.0
    %1571 = vmatprep.subr.mxu0 0.0
    %1572 = vmatpush1.msra.mxu0 0.0
    %1573 = vmatprep.subr.mxu0 0.0
    %1574 = vmatpush1.msra.mxu0 0.0
    %1575 = vmatprep.subr.mxu0 0.0
    %1576 = vmatpush1.msra.mxu0 0.0
    %1577 = vmatprep.mubr.f32.mxu0 0.0
    %1578 = vmatmul.mubr.f32.gmra.mrb[0].mxu0 %v353
    %v1579 = vpop.f32.mrb[0].mxu0
    %v1580 = vadd.f32 0.0, %v1579
    %v1581 = vpop.f32.mrb[0].mxu0
    %1582 = vmatprep.mubr.f32.mxu0 0.0
    %1583 = vmatmul.mubr.f32.gmra.mrb[0].mxu0 %v356
    %v1584 = vpop.f32.mrb[0].mxu0
    %v1585 = vadd.f32 0.0, %v1584
    %v1586 = vpop.f32.mrb[0].mxu0
    %1587 = vmatprep.mubr.f32.mxu0 0.0
    %1588 = vmatmul.mubr.f32.gmra.mrb[0].mxu0 %v359
    %v1589 = vpop.f32.mrb[0].mxu0
    %v1590 = vadd.f32 0.0, %v1589
    %v1591 = vpop.f32.mrb[0].mxu0
    %1592 = vmatprep.mubr.f32.mxu0 0.0
    %1593 = vmatmul.mubr.f32.gmra.mrb[0].mxu0 %v362
    %v1594 = vpop.f32.mrb[0].mxu0
    %v1595 = vadd.f32 0.0, %v1594
    %v1596 = vpop.f32.mrb[0].mxu0
    %1597 = vdwg.mxu0
    %v1598 = vadd.f32 %v1580, %v1585
    %v1599 = vadd.f32 %v1598, %v1590
    %v1600 = vadd.f32 %v1599, %v1595
    %v1601 = vrot.slane %v1600, 4
    %v1602 = vadd.f32 %v1600, %v1601
    %v1603 = vrot.slane %v1602, 2
    %v1604 = vadd.f32 %v1602, %v1603
    %v1605 = vrot.slane %v1604, 1
    %v1606 = vadd.f32 %v1604, %v1605
    %v1607 = vmul.f32 %v1580, %v1580
    %v1608 = vmul.f32 %v1585, %v1585
    %v1609 = vmul.f32 %v1590, %v1590
    %v1610 = vmul.f32 %v1595, %v1595
    %v1611 = vadd.f32 %v1607, %v1608
    %v1612 = vadd.f32 %v1611, %v1609
    %v1613 = vadd.f32 %v1612, %v1610
    %v1614 = vrot.slane %v1613, 4
    %v1615 = vadd.f32 %v1613, %v1614
    %v1616 = vrot.slane %v1615, 2
    %v1617 = vadd.f32 %v1615, %v1616
    %v1618 = vrot.slane %v1617, 1
    %v1619 = vadd.f32 %v1617, %v1618
    %1620 = vmatprep.subr.mxu0 0.0
    %1621 = vmatpush1.msra.mxu0 %v113
    %1622 = vmatprep.subr.mxu0 0.0
    %1623 = vmatpush1.msra.mxu0 %v114
    %1624 = vmatprep.subr.mxu0 0.0
    %1625 = vmatpush1.msra.mxu0 %v115
    %1626 = vmatprep.subr.mxu0 0.0
    %1627 = vmatpush1.msra.mxu0 %v116
    %1628 = vmatprep.subr.mxu0 0.0
    %1629 = vmatpush1.msra.mxu0 %v117
    %1630 = vmatprep.subr.mxu0 0.0
    %1631 = vmatpush1.msra.mxu0 %v118
    %1632 = vmatprep.subr.mxu0 0.0
    %1633 = vmatpush1.msra.mxu0 %v119
    %1634 = vmatprep.subr.mxu0 0.0
    %1635 = vmatpush1.msra.mxu0 %v120
    %1636 = vmatprep.subr.mxu0 0.0
    %1637 = vmatpush1.msra.mxu0 %v121
    %1638 = vmatprep.subr.mxu0 0.0
    %1639 = vmatpush1.msra.mxu0 %v122
    %1640 = vmatprep.subr.mxu0 0.0
    %1641 = vmatpush1.msra.mxu0 %v123
    %1642 = vmatprep.subr.mxu0 0.0
    %1643 = vmatpush1.msra.mxu0 %v124
    %1644 = vmatprep.subr.mxu0 0.0
    %1645 = vmatpush1.msra.mxu0 %v125
    %1646 = vmatprep.subr.mxu0 0.0
    %1647 = vmatpush1.msra.mxu0 %v126
    %1648 = vmatprep.subr.mxu0 0.0
    %1649 = vmatpush1.msra.mxu0 %v127
    %1650 = vmatprep.subr.mxu0 0.0
    %1651 = vmatpush1.msra.mxu0 %v128
    %1652 = vmatprep.subr.mxu0 0.0
    %1653 = vmatpush1.msra.mxu0 0.0
    %1654 = vmatprep.subr.mxu0 0.0
    %1655 = vmatpush1.msra.mxu0 0.0
    %1656 = vmatprep.subr.mxu0 0.0
    %1657 = vmatpush1.msra.mxu0 0.0
    %1658 = vmatprep.subr.mxu0 0.0
    %1659 = vmatpush1.msra.mxu0 0.0
    %1660 = vmatprep.subr.mxu0 0.0
    %1661 = vmatpush1.msra.mxu0 0.0
    %1662 = vmatprep.subr.mxu0 0.0
    %1663 = vmatpush1.msra.mxu0 0.0
    %1664 = vmatprep.subr.mxu0 0.0
    %1665 = vmatpush1.msra.mxu0 0.0
    %1666 = vmatprep.subr.mxu0 0.0
    %1667 = vmatpush1.msra.mxu0 0.0
    %1668 = vmatprep.subr.mxu0 0.0
    %1669 = vmatpush1.msra.mxu0 0.0
    %1670 = vmatprep.subr.mxu0 0.0
    %1671 = vmatpush1.msra.mxu0 0.0
    %1672 = vmatprep.subr.mxu0 0.0
    %1673 = vmatpush1.msra.mxu0 0.0
    %1674 = vmatprep.subr.mxu0 0.0
    %1675 = vmatpush1.msra.mxu0 0.0
    %1676 = vmatprep.subr.mxu0 0.0
    %1677 = vmatpush1.msra.mxu0 0.0
    %1678 = vmatprep.subr.mxu0 0.0
    %1679 = vmatpush1.msra.mxu0 0.0
    %1680 = vmatprep.subr.mxu0 0.0
    %1681 = vmatpush1.msra.mxu0 0.0
    %1682 = vmatprep.subr.mxu0 0.0
    %1683 = vmatpush1.msra.mxu0 0.0
    %1684 = vmatprep.mubr.f32.mxu0 0.0
    %1685 = vmatmul.mubr.f32.gmra.mrb[0].mxu0 %v1606
    %v1686 = vpop.f32.mrb[0].mxu0
    %v1687 = vadd.f32 0.0, %v1686
    %v1688 = vpop.f32.mrb[0].mxu0
    %1689 = vdwg.mxu0
    %1690 = vmatprep.subr.mxu0 0.0
    %1691 = vmatpush1.msra.mxu0 %v113
    %1692 = vmatprep.subr.mxu0 0.0
    %1693 = vmatpush1.msra.mxu0 %v114
    %1694 = vmatprep.subr.mxu0 0.0
    %1695 = vmatpush1.msra.mxu0 %v115
    %1696 = vmatprep.subr.mxu0 0.0
    %1697 = vmatpush1.msra.mxu0 %v116
    %1698 = vmatprep.subr.mxu0 0.0
    %1699 = vmatpush1.msra.mxu0 %v117
    %1700 = vmatprep.subr.mxu0 0.0
    %1701 = vmatpush1.msra.mxu0 %v118
    %1702 = vmatprep.subr.mxu0 0.0
    %1703 = vmatpush1.msra.mxu0 %v119
    %1704 = vmatprep.subr.mxu0 0.0
    %1705 = vmatpush1.msra.mxu0 %v120
    %1706 = vmatprep.subr.mxu0 0.0
    %1707 = vmatpush1.msra.mxu0 %v121
    %1708 = vmatprep.subr.mxu0 0.0
    %1709 = vmatpush1.msra.mxu0 %v122
    %1710 = vmatprep.subr.mxu0 0.0
    %1711 = vmatpush1.msra.mxu0 %v123
    %1712 = vmatprep.subr.mxu0 0.0
    %1713 = vmatpush1.msra.mxu0 %v124
    %1714 = vmatprep.subr.mxu0 0.0
    %1715 = vmatpush1.msra.mxu0 %v125
    %1716 = vmatprep.subr.mxu0 0.0
    %1717 = vmatpush1.msra.mxu0 %v126
    %1718 = vmatprep.subr.mxu0 0.0
    %1719 = vmatpush1.msra.mxu0 %v127
    %1720 = vmatprep.subr.mxu0 0.0
    %1721 = vmatpush1.msra.mxu0 %v128
    %1722 = vmatprep.subr.mxu0 0.0
    %1723 = vmatpush1.msra.mxu0 0.0
    %1724 = vmatprep.subr.mxu0 0.0
    %1725 = vmatpush1.msra.mxu0 0.0
    %1726 = vmatprep.subr.mxu0 0.0
    %1727 = vmatpush1.msra.mxu0 0.0
    %1728 = vmatprep.subr.mxu0 0.0
    %1729 = vmatpush1.msra.mxu0 0.0
    %1730 = vmatprep.subr.mxu0 0.0
    %1731 = vmatpush1.msra.mxu0 0.0
    %1732 = vmatprep.subr.mxu0 0.0
    %1733 = vmatpush1.msra.mxu0 0.0
    %1734 = vmatprep.subr.mxu0 0.0
    %1735 = vmatpush1.msra.mxu0 0.0
    %1736 = vmatprep.subr.mxu0 0.0
    %1737 = vmatpush1.msra.mxu0 0.0
    %1738 = vmatprep.subr.mxu0 0.0
    %1739 = vmatpush1.msra.mxu0 0.0
    %1740 = vmatprep.subr.mxu0 0.0
    %1741 = vmatpush1.msra.mxu0 0.0
    %1742 = vmatprep.subr.mxu0 0.0
    %1743 = vmatpush1.msra.mxu0 0.0
    %1744 = vmatprep.subr.mxu0 0.0
    %1745 = vmatpush1.msra.mxu0 0.0
    %1746 = vmatprep.subr.mxu0 0.0
    %1747 = vmatpush1.msra.mxu0 0.0
    %1748 = vmatprep.subr.mxu0 0.0
    %1749 = vmatpush1.msra.mxu0 0.0
    %1750 = vmatprep.subr.mxu0 0.0
    %1751 = vmatpush1.msra.mxu0 0.0
    %1752 = vmatprep.subr.mxu0 0.0
    %1753 = vmatpush1.msra.mxu0 0.0
    %1754 = vmatprep.mubr.f32.mxu0 0.0
    %1755 = vmatmul.mubr.f32.gmra.mrb[0].mxu0 %v1619
    %v1756 = vpop.f32.mrb[0].mxu0
    %v1757 = vadd.f32 0.0, %v1756
    %v1758 = vpop.f32.mrb[0].mxu0
    %1759 = vdwg.mxu0
    %v1760 = vmul.f32 %v1687, %v1687
    %v1761 = vsub.f32 %v1757, %v1760
    %v1762 = vadd.f32 %v1761, 1e-05
    %v1763 = vrsqrt.pop %v1762
    %v1765 = vrot.slane %v1763, 4
    %v1767 = vmul.f32 %v129, %v1765
    %v1769 = vrot.slane %v1767, 4
    %v1771 = vmul.f32 %v1687, %v1769
    %v1773 = vrot.slane %v1771, 3
    %v1775 = vsub.f32 %v129, %v1773
    %v1776 = vlaneseq
    %v1777 = vshrl.u32 %v1776, 7
    %v1778 = vsub.s32 2, %v1777
    %v1779 = vrot.slane %v1496, %v1778
    %v1780 = vmul.f32 %v1323, %v1779
    %v1781 = vmul.f32 %v1324, %v1779
    %v1782 = vmul.f32 %v1325, %v1779
    %v1783 = vmul.f32 %v1326, %v1779
    %v1784 = vlaneseq
    %v1785 = vshrl.u32 %v1784, 7
    %v1786 = vsub.s32 4, %v1785
    %v1787 = vrot.slane %v1767, %v1786
    %v1788 = vmul.f32 %v1580, %v1787
    %v1789 = vmul.f32 %v1585, %v1787
    %v1790 = vmul.f32 %v1590, %v1787
    %v1791 = vmul.f32 %v1595, %v1787
    %v1792 = vadd.f32 %v1780, %v1788
    %v1793 = vadd.f32 %v1781, %v1789
    %v1794 = vadd.f32 %v1782, %v1790
    %v1795 = vadd.f32 %v1783, %v1791
    %v1797 = vrot.slane %v1775, 2
    %v1799 = vadd.f32 %v1504, %v1797
    %v1800 = vlaneseq
    %v1801 = vshrl.u32 %v1800, 7
    %v1802 = vsub.s32 3, %v1801
    %v1803 = vrot.slane %v1799, %v1802
    %v1804 = vadd.f32 %v1792, %v1803
    %v1805 = vadd.f32 %v1793, %v1803
    %v1806 = vadd.f32 %v1794, %v1803
    %v1807 = vadd.f32 %v1795, %v1803
    %v1808 = vmax.f32 %v1804, 0.0
    %v1809 = vmax.f32 %v1805, 0.0
    %v1810 = vmax.f32 %v1806, 0.0
    %v1811 = vmax.f32 %v1807, 0.0
    %1812 = vst [vmem:[#allocation13] sm:$0xff] %v1808
    %1813 = vst [vmem:[#allocation13 + $0x8] sm:$0xff] %v1809
    %1814 = vst [vmem:[#allocation13 + $0x10] sm:$0xff] %v1810
    %1815 = vst [vmem:[#allocation13 + $0x18] sm:$0xff] %v1811
    // Predicated region
    $region54: #{tpu_custom_call.1} parent=1 // pred_check
      _
    $region55: #{tpu_custom_call.1} parent=1 // pred_check_branch
      %1817 = sbr.rel (0) target = $region57
    $region56: #{tpu_custom_call.1} parent=1 // pred_region
      %s1819 = ssub.s32 512, 512
      %1820 = vsyncadd [#allocation4], %s1819
      %s1821 = sshll.u32 [#allocation13], 4
      %s1822 = int_to_ptr.vmem [resolvable:$true] %s1821
      %1827 = dma.vmem_to_hbm [thread:$0]  %s1822, 512, %s7, [#allocation4], 128, 128, 8
    $region57: #{tpu_custom_call.1} parent=1 // pred_fallthru
      _
    // Predicated region
    $region58: #{tpu_custom_call.1} parent=1 // pred_check
      _
    $region59: #{tpu_custom_call.1} parent=1 // pred_check_branch
      %1829 = sbr.rel (0) target = $region61
    $region60: #{tpu_custom_call.1} parent=1 // pred_region
      %1830 = dma.done [#allocation4], 512
    $region61: #{tpu_custom_call.1} parent=1 // pred_fallthru
      _
    %1831 = vsyncpa [#allocation3], 1
    %1832 = vsyncpa [#allocation6], 1
    %1833 = vsyncpa [#allocation9], 1
    %1834 = vsyncpa [#allocation12], 1
    %1835 = vsyncpa [#allocation4], 1

</llo_original>
